<compile_context>
chip_gen: v5e
topology: v5e:2x2
jax: 0.10.0
libtpu: 0.0.40
codegen_flags: <defaults>
</compile_context>

<pallas_src>
import functools

import jax
import jax.numpy as jnp
from jax.experimental import pallas as pl
from jax.experimental.pallas import tpu as pltpu


def _mha_kernel(q_ref, k_ref, v_ref, w_ref, b_ref, o_ref,
                *, num_heads, head_dim, batch, seq_len, causal):
    H, Dh, B, S = num_heads, head_dim, batch, seq_len
    N = B * S
    E = H * Dh

    q32 = q_ref[...]                       # (N, E) f32 — kept for the residual
    b_all = b_ref[...]                     # (6, E): [bq*inv_s, bk, bv, bo, gamma, beta]

    # --- Q/K/V projections: three E-wide MXU matmuls on the original (E,E) weights.
    #     1/sqrt(Dh) is pre-folded into Wq / bq in prepare_params().
    Q = jnp.dot(q32,        w_ref[0], preferred_element_type=jnp.float32) + b_all[0:1]
    K = jnp.dot(k_ref[...], w_ref[1], preferred_element_type=jnp.float32) + b_all[1:2]
    V = jnp.dot(v_ref[...], w_ref[2], preferred_element_type=jnp.float32) + b_all[2:3]

    # --- Split into heads only where the attention einsums require it. ---
    Qh = jnp.transpose(Q.reshape(N, H, Dh), (1, 0, 2))      # (H, N, Dh)
    Kh = jnp.transpose(K.reshape(N, H, Dh), (1, 0, 2))
    Vh = jnp.transpose(V.reshape(N, H, Dh), (1, 0, 2))

    scores = jnp.einsum('hqd,hkd->hqk', Qh, Kh,
                        preferred_element_type=jnp.float32)  # (H, N, N)

    # Block-diagonal (per-batch) mask + optional causal mask; built once, all heads
    # share it.  S power-of-two -> shift/AND compare instead of integer divide.
    if (B > 1) or causal:
        row = jax.lax.broadcasted_iota(jnp.int32, (N, N), 0)
        col = jax.lax.broadcasted_iota(jnp.int32, (N, N), 1)
        if (S & (S - 1)) == 0:
            keep = ((row ^ col) & ~(S - 1)) == 0             # same batch block
        else:
            keep = (row // S) == (col // S)
        if causal:
            keep = jnp.logical_and(keep, col <= row)
        scores = jnp.where(keep[None], scores, -1e30)        # diagonal always kept

    # --- Softmax over keys (f32, numerically stable); EUP exp + reciprocal*mul. ---
    m = jnp.max(scores, axis=-1, keepdims=True)
    e = jnp.exp(scores - m)
    p = e * pl.reciprocal(jnp.sum(e, axis=-1, keepdims=True), approx=False)

    ctx = jnp.einsum('hqk,hkd->hqd', p, Vh,
                     preferred_element_type=jnp.float32)     # (H, N, Dh)

    # --- Head concat back along lanes, single E-wide output projection. ---
    ctx2 = jnp.transpose(ctx, (1, 0, 2)).reshape(N, E)       # (N, E)
    out = jnp.dot(ctx2, w_ref[3], preferred_element_type=jnp.float32) + b_all[3:4]

    # --- Residual + LayerNorm over E (eps = 1e-5, elementwise affine), all f32. ---
    x = q32 + out
    mean = jnp.mean(x, axis=-1, keepdims=True)
    xc = x - mean
    var = jnp.mean(xc * xc, axis=-1, keepdims=True)
    y = xc * jax.lax.rsqrt(var + 1e-5)
    # NOTE: E=32 < 128 lanes -> masked store; negligible at 2 KB of output.
    o_ref[...] = (y * b_all[4:5] + b_all[5:6]).astype(o_ref.dtype)


def prepare_params(params, *, num_heads):
    """One-time packing of module parameters into two kernel operands.

    Returns:
      w_stack: (4, E, E) f32 = [Wq * 1/sqrt(Dh), Wk, Wv, Wo]   (weights as (in, out))
      b_stack: (6, E)    f32 = [bq * 1/sqrt(Dh), bk, bv, bo, gamma, beta]
    """
    (wq, bq, wk, bk, wv, bv, wo, bo, gamma, beta) = params
    E = wq.shape[0]
    Dh = E // num_heads
    inv_scale = 1.0 / (Dh ** 0.5)
    w_stack = jnp.stack([wq * inv_scale, wk, wv, wo]).astype(jnp.float32)
    b_stack = jnp.concatenate([bq * inv_scale, bk, bv, bo, gamma, beta],
                              axis=0).astype(jnp.float32)
    return w_stack, b_stack


def multi_head_attention(q, k, v, prepared, *, num_heads, causal=False):
    """q, k, v: (B, S, E) float32.  `prepared` = prepare_params(...).  Eval-mode."""
    B, S, E = q.shape
    assert E % num_heads == 0
    Dh = E // num_heads
    N = B * S
    w_stack, b_stack = prepared

    kern = functools.partial(_mha_kernel, num_heads=num_heads, head_dim=Dh,
                             batch=B, seq_len=S, causal=causal)

    cost = pl.CostEstimate(
        flops=8 * N * E * E + 4 * N * N * E,
        transcendentals=num_heads * N * N + 2 * N,
        bytes_accessed=4 * (4 * N * E + 4 * E * E + 6 * E),
    )

    vmem = pltpu.MemorySpace.VMEM
    out2 = pl.pallas_call(
        kern,
        out_shape=jax.ShapeDtypeStruct((N, E), q.dtype),
        in_specs=[pl.BlockSpec(memory_space=vmem)] * 5,
        out_specs=pl.BlockSpec(memory_space=vmem),
        cost_estimate=cost,
    )(q.reshape(N, E), k.reshape(N, E), v.reshape(N, E), w_stack, b_stack)

    return out2.reshape(B, S, E)


def _init_params(key, embed_dim):
    """Deterministic synthetic params. Linear weights stored as (in, out)."""
    bound = 1.0 / (embed_dim ** 0.5)
    keys = jax.random.split(key, 8)

    def lin(kw, kb):
        w = jax.random.uniform(kw, (embed_dim, embed_dim), jnp.float32, -bound, bound)
        b = jax.random.uniform(kb, (1, embed_dim), jnp.float32, -bound, bound)
        return w, b

    wq, bq = lin(keys[0], keys[1])
    wk, bk = lin(keys[2], keys[3])
    wv, bv = lin(keys[4], keys[5])
    wo, bo = lin(keys[6], keys[7])
    gamma = jnp.ones((1, embed_dim), jnp.float32)   # nn.LayerNorm default weight
    beta = jnp.zeros((1, embed_dim), jnp.float32)   # nn.LayerNorm default bias
    return (wq, bq, wk, bk, wv, bv, wo, bo, gamma, beta)


def _reference(q, k, v, params, *, num_heads, causal=False):
    """Plain-JAX reference mirroring the PyTorch forward (eval mode)."""
    (wq, bq, wk, bk, wv, bv, wo, bo, gamma, beta) = params
    B, S, E = q.shape
    Dh = E // num_heads
    scale = Dh ** 0.5

    def proj(x, w, b):
        y = x @ w + b[0]
        return y.reshape(B, S, num_heads, Dh).transpose(0, 2, 1, 3)  # (B,H,S,Dh)

    Q, K, V = proj(q, wq, bq), proj(k, wk, bk), proj(v, wv, bv)
    scores = jnp.einsum("bhqd,bhkd->bhqk", Q, K) / scale
    if causal:
        m = jnp.tril(jnp.ones((S, S)))
        scores = jnp.where(m == 0, -jnp.inf, scores)
    p = jax.nn.softmax(scores, axis=-1)
    attn = jnp.einsum("bhqk,bhkd->bhqd", p, V)
    attn = attn.transpose(0, 2, 1, 3).reshape(B, S, E)
    out = attn @ wo + bo[0]
    x = q + out
    mean = jnp.mean(x, axis=-1, keepdims=True)
    var = jnp.mean(jnp.square(x - mean), axis=-1, keepdims=True)
    return (x - mean) / jnp.sqrt(var + 1e-5) * gamma[0] + beta[0]


if __name__ == "__main__":
    B, S, E, H = 2, 8, 32, 4
    key = jax.random.PRNGKey(0)
    kq, kk, kv, kp = jax.random.split(key, 4)

    q = jax.random.normal(kq, (B, S, E), jnp.float32)
    k = jax.random.normal(kk, (B, S, E), jnp.float32)
    v = jax.random.normal(kv, (B, S, E), jnp.float32)
    params = _init_params(kp, E)

    # Hoisted, one-time parameter packing (not on the per-step path).
    prepared = prepare_params(params, num_heads=H)

    # f32 path (exact semantics of the PyTorch module, eval mode).
    out = jax.block_until_ready(
        multi_head_attention(q, k, v, prepared, num_heads=H, causal=False))
    ref = _reference(q, k, v, params, num_heads=H, causal=False)
    assert out.shape == (B, S, E)
    assert jnp.allclose(out, ref, atol=1e-4, rtol=1e-4), "mismatch vs reference"

    # Causal path.
    out_c = jax.block_until_ready(
        multi_head_attention(q, k, v, prepared, num_heads=H, causal=True))
    ref_c = _reference(q, k, v, params, num_heads=H, causal=True)
    assert jnp.allclose(out_c, ref_c, atol=1e-4, rtol=1e-4), "causal mismatch"

    print("KERNEL_OK")
</pallas_src>

<mosaic_0001>
module attributes {stable_mosaic.version = 11 : i64} {
  func.func @_mha_kernel(%arg0: memref<16x32xf32, #tpu.memory_space<vmem>>, %arg1: memref<16x32xf32, #tpu.memory_space<vmem>>, %arg2: memref<16x32xf32, #tpu.memory_space<vmem>>, %arg3: memref<4x32x32xf32, #tpu.memory_space<vmem>>, %arg4: memref<6x32xf32, #tpu.memory_space<vmem>>, %arg5: memref<16x32xf32, #tpu.memory_space<vmem>>) attributes {dimension_semantics = [], scalar_prefetch = 0 : i64, scratch_operands = 0 : i64, tpu.core_type = #tpu.core_type<tc>} {
    %c0 = arith.constant 0 : index
    %c0_0 = arith.constant 0 : index
    %0 = vector.load %arg0[%c0, %c0_0] : memref<16x32xf32, #tpu.memory_space<vmem>>, vector<16x32xf32>
    %c0_1 = arith.constant 0 : index
    %c0_2 = arith.constant 0 : index
    %1 = vector.load %arg4[%c0_1, %c0_2] : memref<6x32xf32, #tpu.memory_space<vmem>>, vector<6x32xf32>
    %c0_3 = arith.constant 0 : index
    %c0_4 = arith.constant 0 : index
    %c0_5 = arith.constant 0 : index
    %2 = vector.load %arg3[%c0_3, %c0_4, %c0_5] : memref<4x32x32xf32, #tpu.memory_space<vmem>>, vector<1x32x32xf32>
    %3 = vector.shape_cast %2 : vector<1x32x32xf32> to vector<32x32xf32>
    %cst = arith.constant dense<0.000000e+00> : vector<16x32xf32>
    %4 = tpu.matmul %0, %3, %cst {dimension_numbers = #tpu.dot_dimension_numbers<[1], [0], [0], [1], [0, 0, 1, 1], [], []>} : vector<16x32xf32>, vector<32x32xf32>, vector<16x32xf32> -> vector<16x32xf32>
    %5 = vector.extract_strided_slice %1 {offsets = [0, 0], sizes = [1, 32], strides = [1, 1]} : vector<6x32xf32> to vector<1x32xf32>
    %6 = vector.broadcast %5 : vector<1x32xf32> to vector<16x32xf32>
    %7 = arith.addf %4, %6 : vector<16x32xf32>
    %c0_6 = arith.constant 0 : index
    %c0_7 = arith.constant 0 : index
    %8 = vector.load %arg1[%c0_6, %c0_7] : memref<16x32xf32, #tpu.memory_space<vmem>>, vector<16x32xf32>
    %c1 = arith.constant 1 : index
    %c0_8 = arith.constant 0 : index
    %c0_9 = arith.constant 0 : index
    %9 = vector.load %arg3[%c1, %c0_8, %c0_9] : memref<4x32x32xf32, #tpu.memory_space<vmem>>, vector<1x32x32xf32>
    %10 = vector.shape_cast %9 : vector<1x32x32xf32> to vector<32x32xf32>
    %cst_10 = arith.constant dense<0.000000e+00> : vector<16x32xf32>
    %11 = tpu.matmul %8, %10, %cst_10 {dimension_numbers = #tpu.dot_dimension_numbers<[1], [0], [0], [1], [0, 0, 1, 1], [], []>} : vector<16x32xf32>, vector<32x32xf32>, vector<16x32xf32> -> vector<16x32xf32>
    %12 = vector.extract_strided_slice %1 {offsets = [1, 0], sizes = [1, 32], strides = [1, 1]} : vector<6x32xf32> to vector<1x32xf32>
    %13 = vector.broadcast %12 : vector<1x32xf32> to vector<16x32xf32>
    %14 = arith.addf %11, %13 : vector<16x32xf32>
    %c0_11 = arith.constant 0 : index
    %c0_12 = arith.constant 0 : index
    %15 = vector.load %arg2[%c0_11, %c0_12] : memref<16x32xf32, #tpu.memory_space<vmem>>, vector<16x32xf32>
    %c2 = arith.constant 2 : index
    %c0_13 = arith.constant 0 : index
    %c0_14 = arith.constant 0 : index
    %16 = vector.load %arg3[%c2, %c0_13, %c0_14] : memref<4x32x32xf32, #tpu.memory_space<vmem>>, vector<1x32x32xf32>
    %17 = vector.shape_cast %16 : vector<1x32x32xf32> to vector<32x32xf32>
    %cst_15 = arith.constant dense<0.000000e+00> : vector<16x32xf32>
    %18 = tpu.matmul %15, %17, %cst_15 {dimension_numbers = #tpu.dot_dimension_numbers<[1], [0], [0], [1], [0, 0, 1, 1], [], []>} : vector<16x32xf32>, vector<32x32xf32>, vector<16x32xf32> -> vector<16x32xf32>
    %19 = vector.extract_strided_slice %1 {offsets = [2, 0], sizes = [1, 32], strides = [1, 1]} : vector<6x32xf32> to vector<1x32xf32>
    %20 = vector.broadcast %19 : vector<1x32xf32> to vector<16x32xf32>
    %21 = arith.addf %18, %20 : vector<16x32xf32>
    %22 = vector.shape_cast %7 : vector<16x32xf32> to vector<16x4x8xf32>
    %23 = tpu.transpose %22, [1, 0, 2] : vector<16x4x8xf32> -> vector<4x16x8xf32>
    %24 = vector.shape_cast %14 : vector<16x32xf32> to vector<16x4x8xf32>
    %25 = tpu.transpose %24, [1, 0, 2] : vector<16x4x8xf32> -> vector<4x16x8xf32>
    %26 = vector.shape_cast %21 : vector<16x32xf32> to vector<16x4x8xf32>
    %27 = tpu.transpose %26, [1, 0, 2] : vector<16x4x8xf32> -> vector<4x16x8xf32>
    "tpu.trace_start"() <{level = 10 : i32, message = "hqd,hkd->hqk"}> : () -> ()
    %cst_16 = arith.constant dense<0.000000e+00> : vector<4x16x16xf32>
    %28 = tpu.matmul %23, %25, %cst_16 {dimension_numbers = #tpu.dot_dimension_numbers<[2], [2], [1], [1], [0, 0, 0, 1, 1, 1], [0], [0]>} : vector<4x16x8xf32>, vector<4x16x8xf32>, vector<4x16x16xf32> -> vector<4x16x16xf32>
    "tpu.trace_stop"() : () -> ()
    %29 = tpu.iota {dimensions = array<i32: 0>} : vector<16x16xi32>
    %30 = tpu.iota {dimensions = array<i32: 1>} : vector<16x16xi32>
    %31 = arith.xori %29, %30 : vector<16x16xi32>
    %c-8_i32 = arith.constant -8 : i32
    %32 = vector.broadcast %c-8_i32 : i32 to vector<16x16xi32>
    %33 = arith.andi %31, %32 : vector<16x16xi32>
    %c0_i32 = arith.constant 0 : i32
    %34 = vector.broadcast %c0_i32 : i32 to vector<16x16xi32>
    %35 = arith.cmpi eq, %33, %34 : vector<16x16xi32>
    %36 = vector.shape_cast %35 : vector<16x16xi1> to vector<1x16x16xi1>
    %cst_17 = arith.constant -1.000000e+30 : f32
    %37 = vector.shape_cast %36 : vector<1x16x16xi1> to vector<1x16x16xi1>
    %38 = vector.broadcast %37 : vector<1x16x16xi1> to vector<4x16x16xi1>
    %39 = vector.broadcast %cst_17 : f32 to vector<4x16x16xf32>
    %40 = arith.select %38, %28, %39 : vector<4x16x16xi1>, vector<4x16x16xf32>
    %cst_18 = arith.constant dense<0xFF800000> : vector<4x16xf32>
    %41 = vector.multi_reduction <maximumf>, %40, %cst_18 [2] : vector<4x16x16xf32> to vector<4x16xf32>
    %42 = vector.shape_cast %41 : vector<4x16xf32> to vector<4x16x1xf32>
    %43 = vector.broadcast %42 : vector<4x16x1xf32> to vector<4x16x16xf32>
    %44 = arith.subf %40, %43 : vector<4x16x16xf32>
    %45 = math.exp %44 : vector<4x16x16xf32>
    %cst_19 = arith.constant dense<0.000000e+00> : vector<4x16xf32>
    %46 = vector.multi_reduction <add>, %45, %cst_19 [2] : vector<4x16x16xf32> to vector<4x16xf32>
    %47 = vector.shape_cast %46 : vector<4x16xf32> to vector<4x16x1xf32>
    %48 = tpu.reciprocal %47 : vector<4x16x1xf32> -> vector<4x16x1xf32>
    %49 = vector.broadcast %48 : vector<4x16x1xf32> to vector<4x16x16xf32>
    %50 = arith.mulf %45, %49 : vector<4x16x16xf32>
    "tpu.trace_start"() <{level = 10 : i32, message = "hqk,hkd->hqd"}> : () -> ()
    %cst_20 = arith.constant dense<0.000000e+00> : vector<4x16x8xf32>
    %51 = tpu.matmul %50, %27, %cst_20 {dimension_numbers = #tpu.dot_dimension_numbers<[2], [1], [1], [2], [0, 0, 0, 1, 1, 2], [0], [0]>} : vector<4x16x16xf32>, vector<4x16x8xf32>, vector<4x16x8xf32> -> vector<4x16x8xf32>
    "tpu.trace_stop"() : () -> ()
    %52 = tpu.transpose %51, [1, 0, 2] : vector<4x16x8xf32> -> vector<16x4x8xf32>
    %53 = vector.shape_cast %52 : vector<16x4x8xf32> to vector<16x32xf32>
    %c3 = arith.constant 3 : index
    %c0_21 = arith.constant 0 : index
    %c0_22 = arith.constant 0 : index
    %54 = vector.load %arg3[%c3, %c0_21, %c0_22] : memref<4x32x32xf32, #tpu.memory_space<vmem>>, vector<1x32x32xf32>
    %55 = vector.shape_cast %54 : vector<1x32x32xf32> to vector<32x32xf32>
    %cst_23 = arith.constant dense<0.000000e+00> : vector<16x32xf32>
    %56 = tpu.matmul %53, %55, %cst_23 {dimension_numbers = #tpu.dot_dimension_numbers<[1], [0], [0], [1], [0, 0, 1, 1], [], []>} : vector<16x32xf32>, vector<32x32xf32>, vector<16x32xf32> -> vector<16x32xf32>
    %57 = vector.extract_strided_slice %1 {offsets = [3, 0], sizes = [1, 32], strides = [1, 1]} : vector<6x32xf32> to vector<1x32xf32>
    %58 = vector.broadcast %57 : vector<1x32xf32> to vector<16x32xf32>
    %59 = arith.addf %56, %58 : vector<16x32xf32>
    %60 = arith.addf %0, %59 : vector<16x32xf32>
    %cst_24 = arith.constant dense<0.000000e+00> : vector<16xf32>
    %61 = vector.multi_reduction <add>, %60, %cst_24 [1] : vector<16x32xf32> to vector<16xf32>
    %62 = vector.shape_cast %61 : vector<16xf32> to vector<16x1xf32>
    %cst_25 = arith.constant 3.200000e+01 : f32
    %63 = vector.broadcast %cst_25 : f32 to vector<16x1xf32>
    %64 = arith.divf %62, %63 : vector<16x1xf32>
    %65 = vector.broadcast %64 : vector<16x1xf32> to vector<16x32xf32>
    %66 = arith.subf %60, %65 : vector<16x32xf32>
    %67 = arith.mulf %66, %66 : vector<16x32xf32>
    %cst_26 = arith.constant dense<0.000000e+00> : vector<16xf32>
    %68 = vector.multi_reduction <add>, %67, %cst_26 [1] : vector<16x32xf32> to vector<16xf32>
    %69 = vector.shape_cast %68 : vector<16xf32> to vector<16x1xf32>
    %cst_27 = arith.constant 3.200000e+01 : f32
    %70 = vector.broadcast %cst_27 : f32 to vector<16x1xf32>
    %71 = arith.divf %69, %70 : vector<16x1xf32>
    %cst_28 = arith.constant 9.99999974E-6 : f32
    %72 = vector.broadcast %cst_28 : f32 to vector<16x1xf32>
    %73 = arith.addf %71, %72 : vector<16x1xf32>
    %74 = math.rsqrt %73 : vector<16x1xf32>
    %75 = vector.broadcast %74 : vector<16x1xf32> to vector<16x32xf32>
    %76 = arith.mulf %66, %75 : vector<16x32xf32>
    %77 = vector.extract_strided_slice %1 {offsets = [4, 0], sizes = [1, 32], strides = [1, 1]} : vector<6x32xf32> to vector<1x32xf32>
    %78 = vector.broadcast %77 : vector<1x32xf32> to vector<16x32xf32>
    %79 = arith.mulf %76, %78 : vector<16x32xf32>
    %80 = vector.extract_strided_slice %1 {offsets = [5, 0], sizes = [1, 32], strides = [1, 1]} : vector<6x32xf32> to vector<1x32xf32>
    %81 = vector.broadcast %80 : vector<1x32xf32> to vector<16x32xf32>
    %82 = arith.addf %79, %81 : vector<16x32xf32>
    %c0_29 = arith.constant 0 : index
    %c0_30 = arith.constant 0 : index
    %83 = vector.load %arg5[%c0_29, %c0_30] : memref<16x32xf32, #tpu.memory_space<vmem>>, vector<16x32xf32>
    tpu.vector_store %arg5[%c0_29, %c0_30], %82 {strides = array<i32>} : memref<16x32xf32, #tpu.memory_space<vmem>>, vector<16x32xf32>,
    return
  }
}

</mosaic_0001>

<llo_original>
// kernel: tpu_custom_call.1
$region0: #{tpu_custom_call.1}
  #allocation0 [shape = 'u32[]', space=smem, size = 0x4, offset = 0x4, fixed_abs, tag = 'smem constant byte address 0x4 - core index']
  #allocation1 [shape = 'u32[72,128]{1,0:T(1,128)}', space=vmem, size = 0x9000, scoped, tag = 'internal scratch']
  %s0 = inlined_call_operand.hbm [shape: f32[16,32], index: 0, kind: input, shape index: {}]
  %s1 = inlined_call_operand.hbm [shape: f32[16,32], index: 1, kind: input, shape index: {}]
  %s2 = inlined_call_operand.hbm [shape: f32[16,32], index: 2, kind: input, shape index: {}]
  %s3 = inlined_call_operand.hbm [shape: f32[4,32,32], index: 3, kind: input, shape index: {}]
  %s4 = inlined_call_operand.hbm [shape: f32[6,32], index: 4, kind: input, shape index: {}]
  %s5 = inlined_call_operand.hbm [shape: f32[16,32], index: 5, kind: output, shape index: {}]
  %s6 = sld [smem:[#allocation0]]
  $region50: #{tpu_custom_call.1} parent=0
    _
  %s8 = ssub.s32 1, %s6
  %s9 = scalar_select 0, %s8, %s6
  $region1: #{tpu_custom_call.1} parent=0
    #allocation2 [shape = 'u8[8192]{0}', space=vmem, size = 0x2000, scoped, tag = 'input window, operand 0, single buffered']
    #allocation3 [shape = 's32[1]{0}', space=sflag, size = 0x4, scoped, tag = 'scoped memory for tpu_custom_call.1']
    #allocation4 [shape = 's32[1]{0}', space=sflag, size = 0x4, scoped, tag = 'scoped memory for tpu_custom_call.1']
    #allocation5 [shape = 'u8[8192]{0}', space=vmem, size = 0x2000, scoped, tag = 'input window, operand 1, single buffered']
    #allocation6 [shape = 's32[1]{0}', space=sflag, size = 0x4, scoped, tag = 'scoped memory for tpu_custom_call.1']
    #allocation7 [shape = 'u8[8192]{0}', space=vmem, size = 0x2000, scoped, tag = 'input window, operand 2, single buffered']
    #allocation8 [shape = 'u8[65536]{0}', space=vmem, size = 0x10000, scoped, tag = 'input window, operand 3, single buffered']
    #allocation9 [shape = 's32[1]{0}', space=sflag, size = 0x4, scoped, tag = 'scoped memory for tpu_custom_call.1']
    #allocation10 [shape = 'u8[4096]{0}', space=vmem, size = 0x1000, scoped, tag = 'input window, operand 4, single buffered']
    #allocation11 [shape = 'u8[8192]{0}', space=vmem, size = 0x2000, scoped, tag = 'output window, operand 0, single buffered']
    %10 = vsyncpa [#allocation3], 0
    %11 = vsyncpa [#allocation6], 0
    %12 = vsyncpa [#allocation9], 0
    %13 = vsyncpa [#allocation4], 0
    // Predicated region
    $region2: #{tpu_custom_call.1} parent=1 // pred_check
      _
    $region3: #{tpu_custom_call.1} parent=1 // pred_check_branch
      %15 = sbr.rel (0) target = $region5
    $region4: #{tpu_custom_call.1} parent=1 // pred_region
      %17 = vsyncadd [#allocation3], 0
      %s18 = sshll.u32 %s0, 4
      %s19 = int_to_ptr.hbm [resolvable:$true] %s18
      %s20 = sshll.u32 [#allocation2], 4
      %s21 = int_to_ptr.vmem [resolvable:$true] %s20
      %26 = dma.hbm_to_vmem [thread:$0]  %s19, 256, %s21, [#allocation3], 128, 128, 8
    $region5: #{tpu_custom_call.1} parent=1 // pred_fallthru
      _
    // Predicated region
    $region6: #{tpu_custom_call.1} parent=1 // pred_check
      _
    $region7: #{tpu_custom_call.1} parent=1 // pred_check_branch
      %28 = sbr.rel (0) target = $region9
    $region8: #{tpu_custom_call.1} parent=1 // pred_region
      %30 = vsyncadd [#allocation6], 0
      %s31 = sshll.u32 %s1, 4
      %s32 = int_to_ptr.hbm [resolvable:$true] %s31
      %s33 = sshll.u32 [#allocation5], 4
      %s34 = int_to_ptr.vmem [resolvable:$true] %s33
      %39 = dma.hbm_to_vmem [thread:$0]  %s32, 256, %s34, [#allocation6], 128, 128, 8
    $region9: #{tpu_custom_call.1} parent=1 // pred_fallthru
      _
    // Predicated region
    $region10: #{tpu_custom_call.1} parent=1 // pred_check
      _
    $region11: #{tpu_custom_call.1} parent=1 // pred_check_branch
      %41 = sbr.rel (0) target = $region13
    $region12: #{tpu_custom_call.1} parent=1 // pred_region
      %43 = vsyncadd [#allocation6], 0
      %s44 = sshll.u32 %s2, 4
      %s45 = int_to_ptr.hbm [resolvable:$true] %s44
      %s46 = sshll.u32 [#allocation7], 4
      %s47 = int_to_ptr.vmem [resolvable:$true] %s46
      %52 = dma.hbm_to_vmem [thread:$0]  %s45, 256, %s47, [#allocation6], 128, 128, 8
    $region13: #{tpu_custom_call.1} parent=1 // pred_fallthru
      _
    // Predicated region
    $region14: #{tpu_custom_call.1} parent=1 // pred_check
      _
    $region15: #{tpu_custom_call.1} parent=1 // pred_check_branch
      %54 = sbr.rel (0) target = $region17
    $region16: #{tpu_custom_call.1} parent=1 // pred_region
      %56 = vsyncadd [#allocation9], 0
      %s57 = sshll.u32 %s3, 4
      %s58 = int_to_ptr.hbm [resolvable:$true] %s57
      %s59 = sshll.u32 [#allocation8], 4
      %s60 = int_to_ptr.vmem [resolvable:$true] %s59
      %65 = dma.hbm_to_vmem [thread:$0]  %s58, 2048, %s60, [#allocation9], 128, 128, 8
    $region17: #{tpu_custom_call.1} parent=1 // pred_fallthru
      _
    // Predicated region
    $region18: #{tpu_custom_call.1} parent=1 // pred_check
      _
    $region19: #{tpu_custom_call.1} parent=1 // pred_check_branch
      %67 = sbr.rel (0) target = $region21
    $region20: #{tpu_custom_call.1} parent=1 // pred_region
      %69 = vsyncadd [#allocation9], 0
      %s71 = sshll.u32 %s4, 4
      %s72 = int_to_ptr.hbm [resolvable:$true] %s71
      %s73 = sshll.u32 [#allocation10], 4
      %s74 = int_to_ptr.vmem [resolvable:$true] %s73
      %76 = dma.hbm_to_vmem [thread:$0]  %s72, 128, %s74, [#allocation9]
    $region21: #{tpu_custom_call.1} parent=1 // pred_fallthru
      _
    // Predicated region
    $region22: #{tpu_custom_call.1} parent=1 // pred_check
      _
    $region23: #{tpu_custom_call.1} parent=1 // pred_check_branch
      %78 = sbr.rel (0) target = $region25
    $region24: #{tpu_custom_call.1} parent=1 // pred_region
      %80 = dma.done [#allocation3], 256
    $region25: #{tpu_custom_call.1} parent=1 // pred_fallthru
      _
    // Predicated region
    $region26: #{tpu_custom_call.1} parent=1 // pred_check
      _
    $region27: #{tpu_custom_call.1} parent=1 // pred_check_branch
      %82 = sbr.rel (0) target = $region29
    $region28: #{tpu_custom_call.1} parent=1 // pred_region
      %84 = dma.done [#allocation6], 256
    $region29: #{tpu_custom_call.1} parent=1 // pred_fallthru
      _
    // Predicated region
    $region30: #{tpu_custom_call.1} parent=1 // pred_check
      _
    $region31: #{tpu_custom_call.1} parent=1 // pred_check_branch
      %86 = sbr.rel (0) target = $region33
    $region32: #{tpu_custom_call.1} parent=1 // pred_region
      %88 = dma.done [#allocation6], 256
    $region33: #{tpu_custom_call.1} parent=1 // pred_fallthru
      _
    // Predicated region
    $region34: #{tpu_custom_call.1} parent=1 // pred_check
      _
    $region35: #{tpu_custom_call.1} parent=1 // pred_check_branch
      %90 = sbr.rel (0) target = $region37
    $region36: #{tpu_custom_call.1} parent=1 // pred_region
      %92 = dma.done [#allocation9], 2048
    $region37: #{tpu_custom_call.1} parent=1 // pred_fallthru
      _
    // Predicated region
    $region38: #{tpu_custom_call.1} parent=1 // pred_check
      _
    $region39: #{tpu_custom_call.1} parent=1 // pred_check_branch
      %94 = sbr.rel (0) target = $region41
    $region40: #{tpu_custom_call.1} parent=1 // pred_region
      %96 = dma.done [#allocation9], 128
    $region41: #{tpu_custom_call.1} parent=1 // pred_fallthru
      _
    %v97 = vld [vmem:[#allocation2] sm:$0xff]
    %v98 = vld [vmem:[#allocation2 + $0x8] sm:$0xff]
    %v99 = vld [vmem:[#allocation10] sm:$0x3f]
    %v100 = vld [vmem:[#allocation8] sm:$0xff]
    %v101 = vld [vmem:[#allocation8 + $0x8] sm:$0xff]
    %v102 = vld [vmem:[#allocation8 + $0x10] sm:$0xff]
    %v103 = vld [vmem:[#allocation8 + $0x18] sm:$0xff]
    %v104 = vperm.slane %v99, 0
    %vm105 = vcmask 261120
    %v107 = vsel %vm105, %v97, 0
    %v110 = vsel %vm105, %v98, 0
    %112 = vmatpush.msra.mxu0 0.0
    %113 = vmatpush.msra.mxu0 0.0
    %114 = vmatpush.msra.mxu0 0.0
    %115 = vmatpush.msra.mxu0 0.0
    %116 = vmatpush.msra.mxu0 0.0
    %117 = vmatpush.msra.mxu0 0.0
    %118 = vmatpush.msra.mxu0 0.0
    %119 = vmatpush.msra.mxu0 0.0
    %120 = vmatpush.msra.mxu0 0.0
    %121 = vmatpush.msra.mxu0 0.0
    %122 = vmatpush.msra.mxu0 0.0
    %123 = vmatpush.msra.mxu0 0.0
    %124 = vmatpush.msra.mxu0 %v103
    %125 = vmatpush.msra.mxu0 %v102
    %126 = vmatpush.msra.mxu0 %v101
    %127 = vmatpush.msra.mxu0 %v100
    %128 = vmatmul.f32.gmra.mxu0 %v107
    %v129 = vpop.f32.mrf.mxu0
    %v130 = vadd.f32 %v104, %v129
    %131 = vmatmul.f32.gmra.mxu0 %v110
    %v132 = vpop.f32.mrf.mxu0
    %v133 = vadd.f32 %v104, %v132
    %134 = vdwg.mxu0
    %v135 = vld [vmem:[#allocation5] sm:$0xff]
    %v136 = vld [vmem:[#allocation5 + $0x8] sm:$0xff]
    %s137 = scalar_lea.vmem [#allocation8], 32
    %v138 = vld [vmem:[%s137] sm:$0xff]
    %v139 = vld [vmem:[%s137 + $0x8] sm:$0xff]
    %v140 = vld [vmem:[%s137 + $0x10] sm:$0xff]
    %v141 = vld [vmem:[%s137 + $0x18] sm:$0xff]
    %v142 = vperm.slane %v99, 1
    %v144 = vsel %vm105, %v135, 0
    %v147 = vsel %vm105, %v136, 0
    %149 = vmatpush.msra.mxu0 0.0
    %150 = vmatpush.msra.mxu0 0.0
    %151 = vmatpush.msra.mxu0 0.0
    %152 = vmatpush.msra.mxu0 0.0
    %153 = vmatpush.msra.mxu0 0.0
    %154 = vmatpush.msra.mxu0 0.0
    %155 = vmatpush.msra.mxu0 0.0
    %156 = vmatpush.msra.mxu0 0.0
    %157 = vmatpush.msra.mxu0 0.0
    %158 = vmatpush.msra.mxu0 0.0
    %159 = vmatpush.msra.mxu0 0.0
    %160 = vmatpush.msra.mxu0 0.0
    %161 = vmatpush.msra.mxu0 %v141
    %162 = vmatpush.msra.mxu0 %v140
    %163 = vmatpush.msra.mxu0 %v139
    %164 = vmatpush.msra.mxu0 %v138
    %165 = vmatmul.f32.gmra.mxu0 %v144
    %v166 = vpop.f32.mrf.mxu0
    %v167 = vadd.f32 %v142, %v166
    %168 = vmatmul.f32.gmra.mxu0 %v147
    %v169 = vpop.f32.mrf.mxu0
    %v170 = vadd.f32 %v142, %v169
    %171 = vdwg.mxu0
    %v172 = vld [vmem:[#allocation7] sm:$0xff]
    %v173 = vld [vmem:[#allocation7 + $0x8] sm:$0xff]
    %s174 = scalar_lea.vmem [#allocation8], 64
    %v175 = vld [vmem:[%s174] sm:$0xff]
    %v176 = vld [vmem:[%s174 + $0x8] sm:$0xff]
    %v177 = vld [vmem:[%s174 + $0x10] sm:$0xff]
    %v178 = vld [vmem:[%s174 + $0x18] sm:$0xff]
    %v179 = vperm.slane %v99, 2
    %v181 = vsel %vm105, %v172, 0
    %v184 = vsel %vm105, %v173, 0
    %186 = vmatpush.msra.mxu0 0.0
    %187 = vmatpush.msra.mxu0 0.0
    %188 = vmatpush.msra.mxu0 0.0
    %189 = vmatpush.msra.mxu0 0.0
    %190 = vmatpush.msra.mxu0 0.0
    %191 = vmatpush.msra.mxu0 0.0
    %192 = vmatpush.msra.mxu0 0.0
    %193 = vmatpush.msra.mxu0 0.0
    %194 = vmatpush.msra.mxu0 0.0
    %195 = vmatpush.msra.mxu0 0.0
    %196 = vmatpush.msra.mxu0 0.0
    %197 = vmatpush.msra.mxu0 0.0
    %198 = vmatpush.msra.mxu0 %v178
    %199 = vmatpush.msra.mxu0 %v177
    %200 = vmatpush.msra.mxu0 %v176
    %201 = vmatpush.msra.mxu0 %v175
    %202 = vmatmul.f32.gmra.mxu0 %v181
    %v203 = vpop.f32.mrf.mxu0
    %v204 = vadd.f32 %v179, %v203
    %205 = vmatmul.f32.gmra.mxu0 %v184
    %v206 = vpop.f32.mrf.mxu0
    %v207 = vadd.f32 %v179, %v206
    %208 = vdwg.mxu0
    %211 = vrot.lane.b32.xlu0 %v130, 120
    %v212 = vpop.permute.xlu0 %211
    %213 = vrot.lane.b32.xlu0 %v133, 120
    %v214 = vpop.permute.xlu0 %213
    %217 = vrot.lane.b32.xlu0 %v130, 112
    %v218 = vpop.permute.xlu0 %217
    %219 = vrot.lane.b32.xlu0 %v133, 112
    %v220 = vpop.permute.xlu0 %219
    %223 = vrot.lane.b32.xlu0 %v130, 104
    %v224 = vpop.permute.xlu0 %223
    %225 = vrot.lane.b32.xlu0 %v133, 104
    %v226 = vpop.permute.xlu0 %225
    %v229 = vrot.slane %v218, 4
    %vm230 = vcmask 1047556
    %v231 = vsel %vm230, %v229, %v130
    %v232 = vrot.slane %v130, 4
    %v233 = vsel %vm230, %v218, %v232
    %v235 = vunpack.c.l.s4 1983009808
    %v236 = vunpack.c.0.s8 %v235
    %v237 = vperm.slane %v231, %v236
    %v239 = vunpack.c.l.s4 1983009808
    %v240 = vunpack.c.0.s8 %v239
    %v241 = vperm.slane %v233, %v240
    %v242 = vrot.slane %v224, 4
    %v243 = vsel %vm230, %v242, %v212
    %v244 = vrot.slane %v212, 4
    %v245 = vsel %vm230, %v224, %v244
    %v247 = vunpack.c.l.s4 1983009808
    %v248 = vunpack.c.0.s8 %v247
    %v249 = vperm.slane %v243, %v248
    %v251 = vunpack.c.l.s4 1983009808
    %v252 = vunpack.c.0.s8 %v251
    %v253 = vperm.slane %v245, %v252
    %v254 = vrot.slane %v249, 4
    %v255 = vsel %vm230, %v254, %v237
    %v256 = vrot.slane %v237, 4
    %v257 = vsel %vm230, %v249, %v256
    %v259 = vunpack.c.l.s4 1934713408
    %v260 = vunpack.c.0.s8 %v259
    %v261 = vperm.slane %v255, %v260
    %v263 = vunpack.c.l.s4 1934713408
    %v264 = vunpack.c.0.s8 %v263
    %v265 = vperm.slane %v257, %v264
    %v266 = vrot.slane %v253, 4
    %v267 = vsel %vm230, %v266, %v241
    %v268 = vrot.slane %v241, 4
    %v269 = vsel %vm230, %v253, %v268
    %v271 = vunpack.c.l.s4 1934713408
    %v272 = vunpack.c.0.s8 %v271
    %v273 = vperm.slane %v267, %v272
    %v275 = vunpack.c.l.s4 1934713408
    %v276 = vunpack.c.0.s8 %v275
    %v277 = vperm.slane %v269, %v276
    %v278 = vrot.slane %v261, 4
    %v279 = vsel %vm230, 0.0, %v278
    %v280 = vrot.slane %v265, 4
    %v281 = vsel %vm230, 0.0, %v280
    %v282 = vrot.slane %v273, 4
    %v283 = vsel %vm230, 0.0, %v282
    %v284 = vrot.slane %v277, 4
    %v285 = vsel %vm230, 0.0, %v284
    %v286 = vrot.slane %v220, 4
    %v287 = vsel %vm230, %v286, %v133
    %v288 = vrot.slane %v133, 4
    %v289 = vsel %vm230, %v220, %v288
    %v291 = vunpack.c.l.s4 1983009808
    %v292 = vunpack.c.0.s8 %v291
    %v293 = vperm.slane %v287, %v292
    %v295 = vunpack.c.l.s4 1983009808
    %v296 = vunpack.c.0.s8 %v295
    %v297 = vperm.slane %v289, %v296
    %v298 = vrot.slane %v226, 4
    %v299 = vsel %vm230, %v298, %v214
    %v300 = vrot.slane %v214, 4
    %v301 = vsel %vm230, %v226, %v300
    %v303 = vunpack.c.l.s4 1983009808
    %v304 = vunpack.c.0.s8 %v303
    %v305 = vperm.slane %v299, %v304
    %v307 = vunpack.c.l.s4 1983009808
    %v308 = vunpack.c.0.s8 %v307
    %v309 = vperm.slane %v301, %v308
    %v310 = vrot.slane %v305, 4
    %v311 = vsel %vm230, %v310, %v293
    %v312 = vrot.slane %v293, 4
    %v313 = vsel %vm230, %v305, %v312
    %v315 = vunpack.c.l.s4 1934713408
    %v316 = vunpack.c.0.s8 %v315
    %v317 = vperm.slane %v311, %v316
    %v319 = vunpack.c.l.s4 1934713408
    %v320 = vunpack.c.0.s8 %v319
    %v321 = vperm.slane %v313, %v320
    %v322 = vrot.slane %v309, 4
    %v323 = vsel %vm230, %v322, %v297
    %v324 = vrot.slane %v297, 4
    %v325 = vsel %vm230, %v309, %v324
    %v327 = vunpack.c.l.s4 1934713408
    %v328 = vunpack.c.0.s8 %v327
    %v329 = vperm.slane %v323, %v328
    %v331 = vunpack.c.l.s4 1934713408
    %v332 = vunpack.c.0.s8 %v331
    %v333 = vperm.slane %v325, %v332
    %v334 = vrot.slane %v317, 4
    %v335 = vsel %vm230, 0.0, %v334
    %v336 = vrot.slane %v321, 4
    %v337 = vsel %vm230, 0.0, %v336
    %v338 = vrot.slane %v329, 4
    %v339 = vsel %vm230, 0.0, %v338
    %v340 = vrot.slane %v333, 4
    %v341 = vsel %vm230, 0.0, %v340
    %v342 = vsel %vm230, %v280, %v261
    %v344 = vunpack.c.l.s4 1983009808
    %v345 = vunpack.c.0.s8 %v344
    %v346 = vperm.slane %v342, %v345
    %v347 = vrot.slane %v281, 4
    %v348 = vsel %vm230, %v347, %v279
    %v350 = vunpack.c.l.s4 1983009808
    %v351 = vunpack.c.0.s8 %v350
    %v352 = vperm.slane %v348, %v351
    %v353 = vsel %vm230, %v284, %v273
    %v355 = vunpack.c.l.s4 1983009808
    %v356 = vunpack.c.0.s8 %v355
    %v357 = vperm.slane %v353, %v356
    %v358 = vrot.slane %v285, 4
    %v359 = vsel %vm230, %v358, %v283
    %v361 = vunpack.c.l.s4 1983009808
    %v362 = vunpack.c.0.s8 %v361
    %v363 = vperm.slane %v359, %v362
    %v364 = vrot.slane %v352, 4
    %v365 = vsel %vm230, %v364, %v346
    %v366 = vrot.slane %v346, 4
    %v367 = vsel %vm230, %v352, %v366
    %v369 = vunpack.c.l.s4 1934713408
    %v370 = vunpack.c.0.s8 %v369
    %v371 = vperm.slane %v365, %v370
    %v373 = vunpack.c.l.s4 1934713408
    %v374 = vunpack.c.0.s8 %v373
    %v375 = vperm.slane %v367, %v374
    %v376 = vrot.slane %v363, 4
    %v377 = vsel %vm230, %v376, %v357
    %v378 = vrot.slane %v357, 4
    %v379 = vsel %vm230, %v363, %v378
    %v381 = vunpack.c.l.s4 1934713408
    %v382 = vunpack.c.0.s8 %v381
    %v383 = vperm.slane %v377, %v382
    %v385 = vunpack.c.l.s4 1934713408
    %v386 = vunpack.c.0.s8 %v385
    %v387 = vperm.slane %v379, %v386
    %v388 = vrot.slane %v383, 4
    %v389 = vsel %vm230, %v388, %v371
    %v390 = vrot.slane %v371, 4
    %v391 = vsel %vm230, %v383, %v390
    %v392 = vrot.slane %v387, 4
    %v393 = vsel %vm230, %v392, %v375
    %v394 = vrot.slane %v375, 4
    %v395 = vsel %vm230, %v387, %v394
    %v396 = vsel %vm230, %v336, %v317
    %v398 = vunpack.c.l.s4 1983009808
    %v399 = vunpack.c.0.s8 %v398
    %v400 = vperm.slane %v396, %v399
    %v401 = vrot.slane %v337, 4
    %v402 = vsel %vm230, %v401, %v335
    %v404 = vunpack.c.l.s4 1983009808
    %v405 = vunpack.c.0.s8 %v404
    %v406 = vperm.slane %v402, %v405
    %v407 = vsel %vm230, %v340, %v329
    %v409 = vunpack.c.l.s4 1983009808
    %v410 = vunpack.c.0.s8 %v409
    %v411 = vperm.slane %v407, %v410
    %v412 = vrot.slane %v341, 4
    %v413 = vsel %vm230, %v412, %v339
    %v415 = vunpack.c.l.s4 1983009808
    %v416 = vunpack.c.0.s8 %v415
    %v417 = vperm.slane %v413, %v416
    %v418 = vrot.slane %v406, 4
    %v419 = vsel %vm230, %v418, %v400
    %v420 = vrot.slane %v400, 4
    %v421 = vsel %vm230, %v406, %v420
    %v423 = vunpack.c.l.s4 1934713408
    %v424 = vunpack.c.0.s8 %v423
    %v425 = vperm.slane %v419, %v424
    %v427 = vunpack.c.l.s4 1934713408
    %v428 = vunpack.c.0.s8 %v427
    %v429 = vperm.slane %v421, %v428
    %v430 = vrot.slane %v417, 4
    %v431 = vsel %vm230, %v430, %v411
    %v432 = vrot.slane %v411, 4
    %v433 = vsel %vm230, %v417, %v432
    %v435 = vunpack.c.l.s4 1934713408
    %v436 = vunpack.c.0.s8 %v435
    %v437 = vperm.slane %v431, %v436
    %v439 = vunpack.c.l.s4 1934713408
    %v440 = vunpack.c.0.s8 %v439
    %v441 = vperm.slane %v433, %v440
    %v442 = vrot.slane %v437, 4
    %v443 = vsel %vm230, %v442, %v425
    %v444 = vrot.slane %v425, 4
    %v445 = vsel %vm230, %v437, %v444
    %v446 = vrot.slane %v441, 4
    %v447 = vsel %vm230, %v446, %v429
    %v448 = vrot.slane %v429, 4
    %v449 = vsel %vm230, %v441, %v448
    %452 = vrot.lane.b32.xlu0 %v167, 120
    %v453 = vpop.permute.xlu0 %452
    %454 = vrot.lane.b32.xlu0 %v170, 120
    %v455 = vpop.permute.xlu0 %454
    %458 = vrot.lane.b32.xlu0 %v167, 112
    %v459 = vpop.permute.xlu0 %458
    %460 = vrot.lane.b32.xlu0 %v170, 112
    %v461 = vpop.permute.xlu0 %460
    %464 = vrot.lane.b32.xlu0 %v167, 104
    %v465 = vpop.permute.xlu0 %464
    %466 = vrot.lane.b32.xlu0 %v170, 104
    %v467 = vpop.permute.xlu0 %466
    %v470 = vrot.slane %v459, 4
    %v471 = vsel %vm230, %v470, %v167
    %v472 = vrot.slane %v167, 4
    %v473 = vsel %vm230, %v459, %v472
    %v475 = vunpack.c.l.s4 1983009808
    %v476 = vunpack.c.0.s8 %v475
    %v477 = vperm.slane %v471, %v476
    %v479 = vunpack.c.l.s4 1983009808
    %v480 = vunpack.c.0.s8 %v479
    %v481 = vperm.slane %v473, %v480
    %v482 = vrot.slane %v465, 4
    %v483 = vsel %vm230, %v482, %v453
    %v484 = vrot.slane %v453, 4
    %v485 = vsel %vm230, %v465, %v484
    %v487 = vunpack.c.l.s4 1983009808
    %v488 = vunpack.c.0.s8 %v487
    %v489 = vperm.slane %v483, %v488
    %v491 = vunpack.c.l.s4 1983009808
    %v492 = vunpack.c.0.s8 %v491
    %v493 = vperm.slane %v485, %v492
    %v494 = vrot.slane %v489, 4
    %v495 = vsel %vm230, %v494, %v477
    %v496 = vrot.slane %v477, 4
    %v497 = vsel %vm230, %v489, %v496
    %v499 = vunpack.c.l.s4 1934713408
    %v500 = vunpack.c.0.s8 %v499
    %v501 = vperm.slane %v495, %v500
    %v503 = vunpack.c.l.s4 1934713408
    %v504 = vunpack.c.0.s8 %v503
    %v505 = vperm.slane %v497, %v504
    %v506 = vrot.slane %v493, 4
    %v507 = vsel %vm230, %v506, %v481
    %v508 = vrot.slane %v481, 4
    %v509 = vsel %vm230, %v493, %v508
    %v511 = vunpack.c.l.s4 1934713408
    %v512 = vunpack.c.0.s8 %v511
    %v513 = vperm.slane %v507, %v512
    %v515 = vunpack.c.l.s4 1934713408
    %v516 = vunpack.c.0.s8 %v515
    %v517 = vperm.slane %v509, %v516
    %v518 = vrot.slane %v501, 4
    %v519 = vsel %vm230, 0.0, %v518
    %v520 = vrot.slane %v505, 4
    %v521 = vsel %vm230, 0.0, %v520
    %v522 = vrot.slane %v513, 4
    %v523 = vsel %vm230, 0.0, %v522
    %v524 = vrot.slane %v517, 4
    %v525 = vsel %vm230, 0.0, %v524
    %v526 = vrot.slane %v461, 4
    %v527 = vsel %vm230, %v526, %v170
    %v528 = vrot.slane %v170, 4
    %v529 = vsel %vm230, %v461, %v528
    %v531 = vunpack.c.l.s4 1983009808
    %v532 = vunpack.c.0.s8 %v531
    %v533 = vperm.slane %v527, %v532
    %v535 = vunpack.c.l.s4 1983009808
    %v536 = vunpack.c.0.s8 %v535
    %v537 = vperm.slane %v529, %v536
    %v538 = vrot.slane %v467, 4
    %v539 = vsel %vm230, %v538, %v455
    %v540 = vrot.slane %v455, 4
    %v541 = vsel %vm230, %v467, %v540
    %v543 = vunpack.c.l.s4 1983009808
    %v544 = vunpack.c.0.s8 %v543
    %v545 = vperm.slane %v539, %v544
    %v547 = vunpack.c.l.s4 1983009808
    %v548 = vunpack.c.0.s8 %v547
    %v549 = vperm.slane %v541, %v548
    %v550 = vrot.slane %v545, 4
    %v551 = vsel %vm230, %v550, %v533
    %v552 = vrot.slane %v533, 4
    %v553 = vsel %vm230, %v545, %v552
    %v555 = vunpack.c.l.s4 1934713408
    %v556 = vunpack.c.0.s8 %v555
    %v557 = vperm.slane %v551, %v556
    %v559 = vunpack.c.l.s4 1934713408
    %v560 = vunpack.c.0.s8 %v559
    %v561 = vperm.slane %v553, %v560
    %v562 = vrot.slane %v549, 4
    %v563 = vsel %vm230, %v562, %v537
    %v564 = vrot.slane %v537, 4
    %v565 = vsel %vm230, %v549, %v564
    %v567 = vunpack.c.l.s4 1934713408
    %v568 = vunpack.c.0.s8 %v567
    %v569 = vperm.slane %v563, %v568
    %v571 = vunpack.c.l.s4 1934713408
    %v572 = vunpack.c.0.s8 %v571
    %v573 = vperm.slane %v565, %v572
    %v574 = vrot.slane %v557, 4
    %v575 = vsel %vm230, 0.0, %v574
    %v576 = vrot.slane %v561, 4
    %v577 = vsel %vm230, 0.0, %v576
    %v578 = vrot.slane %v569, 4
    %v579 = vsel %vm230, 0.0, %v578
    %v580 = vrot.slane %v573, 4
    %v581 = vsel %vm230, 0.0, %v580
    %v582 = vsel %vm230, %v520, %v501
    %v584 = vunpack.c.l.s4 1983009808
    %v585 = vunpack.c.0.s8 %v584
    %v586 = vperm.slane %v582, %v585
    %v587 = vrot.slane %v521, 4
    %v588 = vsel %vm230, %v587, %v519
    %v590 = vunpack.c.l.s4 1983009808
    %v591 = vunpack.c.0.s8 %v590
    %v592 = vperm.slane %v588, %v591
    %v593 = vsel %vm230, %v524, %v513
    %v595 = vunpack.c.l.s4 1983009808
    %v596 = vunpack.c.0.s8 %v595
    %v597 = vperm.slane %v593, %v596
    %v598 = vrot.slane %v525, 4
    %v599 = vsel %vm230, %v598, %v523
    %v601 = vunpack.c.l.s4 1983009808
    %v602 = vunpack.c.0.s8 %v601
    %v603 = vperm.slane %v599, %v602
    %v604 = vrot.slane %v592, 4
    %v605 = vsel %vm230, %v604, %v586
    %v606 = vrot.slane %v586, 4
    %v607 = vsel %vm230, %v592, %v606
    %v609 = vunpack.c.l.s4 1934713408
    %v610 = vunpack.c.0.s8 %v609
    %v611 = vperm.slane %v605, %v610
    %v613 = vunpack.c.l.s4 1934713408
    %v614 = vunpack.c.0.s8 %v613
    %v615 = vperm.slane %v607, %v614
    %v616 = vrot.slane %v603, 4
    %v617 = vsel %vm230, %v616, %v597
    %v618 = vrot.slane %v597, 4
    %v619 = vsel %vm230, %v603, %v618
    %v621 = vunpack.c.l.s4 1934713408
    %v622 = vunpack.c.0.s8 %v621
    %v623 = vperm.slane %v617, %v622
    %v625 = vunpack.c.l.s4 1934713408
    %v626 = vunpack.c.0.s8 %v625
    %v627 = vperm.slane %v619, %v626
    %v628 = vrot.slane %v623, 4
    %v629 = vsel %vm230, %v628, %v611
    %v630 = vrot.slane %v611, 4
    %v631 = vsel %vm230, %v623, %v630
    %v632 = vrot.slane %v627, 4
    %v633 = vsel %vm230, %v632, %v615
    %v634 = vrot.slane %v615, 4
    %v635 = vsel %vm230, %v627, %v634
    %v636 = vsel %vm230, %v576, %v557
    %v638 = vunpack.c.l.s4 1983009808
    %v639 = vunpack.c.0.s8 %v638
    %v640 = vperm.slane %v636, %v639
    %v641 = vrot.slane %v577, 4
    %v642 = vsel %vm230, %v641, %v575
    %v644 = vunpack.c.l.s4 1983009808
    %v645 = vunpack.c.0.s8 %v644
    %v646 = vperm.slane %v642, %v645
    %v647 = vsel %vm230, %v580, %v569
    %v649 = vunpack.c.l.s4 1983009808
    %v650 = vunpack.c.0.s8 %v649
    %v651 = vperm.slane %v647, %v650
    %v652 = vrot.slane %v581, 4
    %v653 = vsel %vm230, %v652, %v579
    %v655 = vunpack.c.l.s4 1983009808
    %v656 = vunpack.c.0.s8 %v655
    %v657 = vperm.slane %v653, %v656
    %v658 = vrot.slane %v646, 4
    %v659 = vsel %vm230, %v658, %v640
    %v660 = vrot.slane %v640, 4
    %v661 = vsel %vm230, %v646, %v660
    %v663 = vunpack.c.l.s4 1934713408
    %v664 = vunpack.c.0.s8 %v663
    %v665 = vperm.slane %v659, %v664
    %v667 = vunpack.c.l.s4 1934713408
    %v668 = vunpack.c.0.s8 %v667
    %v669 = vperm.slane %v661, %v668
    %v670 = vrot.slane %v657, 4
    %v671 = vsel %vm230, %v670, %v651
    %v672 = vrot.slane %v651, 4
    %v673 = vsel %vm230, %v657, %v672
    %v675 = vunpack.c.l.s4 1934713408
    %v676 = vunpack.c.0.s8 %v675
    %v677 = vperm.slane %v671, %v676
    %v679 = vunpack.c.l.s4 1934713408
    %v680 = vunpack.c.0.s8 %v679
    %v681 = vperm.slane %v673, %v680
    %v682 = vrot.slane %v677, 4
    %v683 = vsel %vm230, %v682, %v665
    %v684 = vrot.slane %v665, 4
    %v685 = vsel %vm230, %v677, %v684
    %v686 = vrot.slane %v681, 4
    %v687 = vsel %vm230, %v686, %v669
    %v688 = vrot.slane %v669, 4
    %v689 = vsel %vm230, %v681, %v688
    %692 = vrot.lane.b32.xlu0 %v204, 120
    %v693 = vpop.permute.xlu0 %692
    %694 = vrot.lane.b32.xlu0 %v207, 120
    %v695 = vpop.permute.xlu0 %694
    %698 = vrot.lane.b32.xlu0 %v204, 112
    %v699 = vpop.permute.xlu0 %698
    %700 = vrot.lane.b32.xlu0 %v207, 112
    %v701 = vpop.permute.xlu0 %700
    %704 = vrot.lane.b32.xlu0 %v204, 104
    %v705 = vpop.permute.xlu0 %704
    %706 = vrot.lane.b32.xlu0 %v207, 104
    %v707 = vpop.permute.xlu0 %706
    %v710 = vrot.slane %v699, 4
    %v711 = vsel %vm230, %v710, %v204
    %v712 = vrot.slane %v204, 4
    %v713 = vsel %vm230, %v699, %v712
    %v715 = vunpack.c.l.s4 1983009808
    %v716 = vunpack.c.0.s8 %v715
    %v717 = vperm.slane %v711, %v716
    %v719 = vunpack.c.l.s4 1983009808
    %v720 = vunpack.c.0.s8 %v719
    %v721 = vperm.slane %v713, %v720
    %v722 = vrot.slane %v705, 4
    %v723 = vsel %vm230, %v722, %v693
    %v724 = vrot.slane %v693, 4
    %v725 = vsel %vm230, %v705, %v724
    %v727 = vunpack.c.l.s4 1983009808
    %v728 = vunpack.c.0.s8 %v727
    %v729 = vperm.slane %v723, %v728
    %v731 = vunpack.c.l.s4 1983009808
    %v732 = vunpack.c.0.s8 %v731
    %v733 = vperm.slane %v725, %v732
    %v734 = vrot.slane %v729, 4
    %v735 = vsel %vm230, %v734, %v717
    %v736 = vrot.slane %v717, 4
    %v737 = vsel %vm230, %v729, %v736
    %v739 = vunpack.c.l.s4 1934713408
    %v740 = vunpack.c.0.s8 %v739
    %v741 = vperm.slane %v735, %v740
    %v743 = vunpack.c.l.s4 1934713408
    %v744 = vunpack.c.0.s8 %v743
    %v745 = vperm.slane %v737, %v744
    %v746 = vrot.slane %v733, 4
    %v747 = vsel %vm230, %v746, %v721
    %v748 = vrot.slane %v721, 4
    %v749 = vsel %vm230, %v733, %v748
    %v751 = vunpack.c.l.s4 1934713408
    %v752 = vunpack.c.0.s8 %v751
    %v753 = vperm.slane %v747, %v752
    %v755 = vunpack.c.l.s4 1934713408
    %v756 = vunpack.c.0.s8 %v755
    %v757 = vperm.slane %v749, %v756
    %v758 = vrot.slane %v741, 4
    %v759 = vsel %vm230, 0.0, %v758
    %v760 = vrot.slane %v745, 4
    %v761 = vsel %vm230, 0.0, %v760
    %v762 = vrot.slane %v753, 4
    %v763 = vsel %vm230, 0.0, %v762
    %v764 = vrot.slane %v757, 4
    %v765 = vsel %vm230, 0.0, %v764
    %v766 = vrot.slane %v701, 4
    %v767 = vsel %vm230, %v766, %v207
    %v768 = vrot.slane %v207, 4
    %v769 = vsel %vm230, %v701, %v768
    %v771 = vunpack.c.l.s4 1983009808
    %v772 = vunpack.c.0.s8 %v771
    %v773 = vperm.slane %v767, %v772
    %v775 = vunpack.c.l.s4 1983009808
    %v776 = vunpack.c.0.s8 %v775
    %v777 = vperm.slane %v769, %v776
    %v778 = vrot.slane %v707, 4
    %v779 = vsel %vm230, %v778, %v695
    %v780 = vrot.slane %v695, 4
    %v781 = vsel %vm230, %v707, %v780
    %v783 = vunpack.c.l.s4 1983009808
    %v784 = vunpack.c.0.s8 %v783
    %v785 = vperm.slane %v779, %v784
    %v787 = vunpack.c.l.s4 1983009808
    %v788 = vunpack.c.0.s8 %v787
    %v789 = vperm.slane %v781, %v788
    %v790 = vrot.slane %v785, 4
    %v791 = vsel %vm230, %v790, %v773
    %v792 = vrot.slane %v773, 4
    %v793 = vsel %vm230, %v785, %v792
    %v795 = vunpack.c.l.s4 1934713408
    %v796 = vunpack.c.0.s8 %v795
    %v797 = vperm.slane %v791, %v796
    %v799 = vunpack.c.l.s4 1934713408
    %v800 = vunpack.c.0.s8 %v799
    %v801 = vperm.slane %v793, %v800
    %v802 = vrot.slane %v789, 4
    %v803 = vsel %vm230, %v802, %v777
    %v804 = vrot.slane %v777, 4
    %v805 = vsel %vm230, %v789, %v804
    %v807 = vunpack.c.l.s4 1934713408
    %v808 = vunpack.c.0.s8 %v807
    %v809 = vperm.slane %v803, %v808
    %v811 = vunpack.c.l.s4 1934713408
    %v812 = vunpack.c.0.s8 %v811
    %v813 = vperm.slane %v805, %v812
    %v814 = vrot.slane %v797, 4
    %v815 = vsel %vm230, 0.0, %v814
    %v816 = vrot.slane %v801, 4
    %v817 = vsel %vm230, 0.0, %v816
    %v818 = vrot.slane %v809, 4
    %v819 = vsel %vm230, 0.0, %v818
    %v820 = vrot.slane %v813, 4
    %v821 = vsel %vm230, 0.0, %v820
    %v822 = vsel %vm230, %v760, %v741
    %v824 = vunpack.c.l.s4 1983009808
    %v825 = vunpack.c.0.s8 %v824
    %v826 = vperm.slane %v822, %v825
    %v827 = vrot.slane %v761, 4
    %v828 = vsel %vm230, %v827, %v759
    %v830 = vunpack.c.l.s4 1983009808
    %v831 = vunpack.c.0.s8 %v830
    %v832 = vperm.slane %v828, %v831
    %v833 = vsel %vm230, %v764, %v753
    %v835 = vunpack.c.l.s4 1983009808
    %v836 = vunpack.c.0.s8 %v835
    %v837 = vperm.slane %v833, %v836
    %v838 = vrot.slane %v765, 4
    %v839 = vsel %vm230, %v838, %v763
    %v841 = vunpack.c.l.s4 1983009808
    %v842 = vunpack.c.0.s8 %v841
    %v843 = vperm.slane %v839, %v842
    %v844 = vrot.slane %v832, 4
    %v845 = vsel %vm230, %v844, %v826
    %v846 = vrot.slane %v826, 4
    %v847 = vsel %vm230, %v832, %v846
    %v849 = vunpack.c.l.s4 1934713408
    %v850 = vunpack.c.0.s8 %v849
    %v851 = vperm.slane %v845, %v850
    %v853 = vunpack.c.l.s4 1934713408
    %v854 = vunpack.c.0.s8 %v853
    %v855 = vperm.slane %v847, %v854
    %v856 = vrot.slane %v843, 4
    %v857 = vsel %vm230, %v856, %v837
    %v858 = vrot.slane %v837, 4
    %v859 = vsel %vm230, %v843, %v858
    %v861 = vunpack.c.l.s4 1934713408
    %v862 = vunpack.c.0.s8 %v861
    %v863 = vperm.slane %v857, %v862
    %v865 = vunpack.c.l.s4 1934713408
    %v866 = vunpack.c.0.s8 %v865
    %v867 = vperm.slane %v859, %v866
    %v868 = vrot.slane %v863, 4
    %v869 = vsel %vm230, %v868, %v851
    %v870 = vrot.slane %v851, 4
    %v871 = vsel %vm230, %v863, %v870
    %v872 = vrot.slane %v867, 4
    %v873 = vsel %vm230, %v872, %v855
    %v874 = vrot.slane %v855, 4
    %v875 = vsel %vm230, %v867, %v874
    %v876 = vsel %vm230, %v816, %v797
    %v878 = vunpack.c.l.s4 1983009808
    %v879 = vunpack.c.0.s8 %v878
    %v880 = vperm.slane %v876, %v879
    %v881 = vrot.slane %v817, 4
    %v882 = vsel %vm230, %v881, %v815
    %v884 = vunpack.c.l.s4 1983009808
    %v885 = vunpack.c.0.s8 %v884
    %v886 = vperm.slane %v882, %v885
    %v887 = vsel %vm230, %v820, %v809
    %v889 = vunpack.c.l.s4 1983009808
    %v890 = vunpack.c.0.s8 %v889
    %v891 = vperm.slane %v887, %v890
    %v892 = vrot.slane %v821, 4
    %v893 = vsel %vm230, %v892, %v819
    %v895 = vunpack.c.l.s4 1983009808
    %v896 = vunpack.c.0.s8 %v895
    %v897 = vperm.slane %v893, %v896
    %v898 = vrot.slane %v886, 4
    %v899 = vsel %vm230, %v898, %v880
    %v900 = vrot.slane %v880, 4
    %v901 = vsel %vm230, %v886, %v900
    %v903 = vunpack.c.l.s4 1934713408
    %v904 = vunpack.c.0.s8 %v903
    %v905 = vperm.slane %v899, %v904
    %v907 = vunpack.c.l.s4 1934713408
    %v908 = vunpack.c.0.s8 %v907
    %v909 = vperm.slane %v901, %v908
    %v910 = vrot.slane %v897, 4
    %v911 = vsel %vm230, %v910, %v891
    %v912 = vrot.slane %v891, 4
    %v913 = vsel %vm230, %v897, %v912
    %v915 = vunpack.c.l.s4 1934713408
    %v916 = vunpack.c.0.s8 %v915
    %v917 = vperm.slane %v911, %v916
    %v919 = vunpack.c.l.s4 1934713408
    %v920 = vunpack.c.0.s8 %v919
    %v921 = vperm.slane %v913, %v920
    %v922 = vrot.slane %v917, 4
    %v923 = vsel %vm230, %v922, %v905
    %v924 = vrot.slane %v905, 4
    %v925 = vsel %vm230, %v917, %v924
    %v926 = vrot.slane %v921, 4
    %v927 = vsel %vm230, %v926, %v909
    %v928 = vrot.slane %v909, 4
    %v929 = vsel %vm230, %v921, %v928
    %vm930 = vcmask 64512
    %v932 = vsel %vm930, %v389, 0
    %v935 = vsel %vm930, %v443, 0
    %v938 = vsel %vm930, %v629, 0
    %v941 = vsel %vm930, %v683, 0
    %943 = vmatpush.xpose.msra.mxu0 0.0
    %944 = vmatpush.xpose.msra.mxu0 0.0
    %945 = vmatpush.xpose.msra.mxu0 0.0
    %946 = vmatpush.xpose.msra.mxu0 0.0
    %947 = vmatpush.xpose.msra.mxu0 0.0
    %948 = vmatpush.xpose.msra.mxu0 0.0
    %949 = vmatpush.xpose.msra.mxu0 0.0
    %950 = vmatpush.xpose.msra.mxu0 0.0
    %951 = vmatpush.xpose.msra.mxu0 0.0
    %952 = vmatpush.xpose.msra.mxu0 0.0
    %953 = vmatpush.xpose.msra.mxu0 0.0
    %954 = vmatpush.xpose.msra.mxu0 0.0
    %955 = vmatpush.xpose.msra.mxu0 0.0
    %956 = vmatpush.xpose.msra.mxu0 0.0
    %957 = vmatpush.xpose.msra.mxu0 %v941
    %958 = vmatpush.xpose.msra.mxu0 %v938
    %959 = vmatmul.f32.gmra.mxu0 %v932
    %v960 = vpop.f32.mrf.mxu0
    %v961 = vadd.f32 0.0, %v960
    %962 = vmatmul.f32.gmra.mxu0 %v935
    %v963 = vpop.f32.mrf.mxu0
    %v964 = vadd.f32 0.0, %v963
    %965 = vdwg.mxu0
    %v967 = vsel %vm930, %v391, 0
    %v970 = vsel %vm930, %v445, 0
    %v973 = vsel %vm930, %v631, 0
    %v976 = vsel %vm930, %v685, 0
    %978 = vmatpush.xpose.msra.mxu0 0.0
    %979 = vmatpush.xpose.msra.mxu0 0.0
    %980 = vmatpush.xpose.msra.mxu0 0.0
    %981 = vmatpush.xpose.msra.mxu0 0.0
    %982 = vmatpush.xpose.msra.mxu0 0.0
    %983 = vmatpush.xpose.msra.mxu0 0.0
    %984 = vmatpush.xpose.msra.mxu0 0.0
    %985 = vmatpush.xpose.msra.mxu0 0.0
    %986 = vmatpush.xpose.msra.mxu0 0.0
    %987 = vmatpush.xpose.msra.mxu0 0.0
    %988 = vmatpush.xpose.msra.mxu0 0.0
    %989 = vmatpush.xpose.msra.mxu0 0.0
    %990 = vmatpush.xpose.msra.mxu0 0.0
    %991 = vmatpush.xpose.msra.mxu0 0.0
    %992 = vmatpush.xpose.msra.mxu0 %v976
    %993 = vmatpush.xpose.msra.mxu0 %v973
    %994 = vmatmul.f32.gmra.mxu0 %v967
    %v995 = vpop.f32.mrf.mxu0
    %v996 = vadd.f32 0.0, %v995
    %997 = vmatmul.f32.gmra.mxu0 %v970
    %v998 = vpop.f32.mrf.mxu0
    %v999 = vadd.f32 0.0, %v998
    %1000 = vdwg.mxu0
    %v1002 = vsel %vm930, %v393, 0
    %v1005 = vsel %vm930, %v447, 0
    %v1008 = vsel %vm930, %v633, 0
    %v1011 = vsel %vm930, %v687, 0
    %1013 = vmatpush.xpose.msra.mxu0 0.0
    %1014 = vmatpush.xpose.msra.mxu0 0.0
    %1015 = vmatpush.xpose.msra.mxu0 0.0
    %1016 = vmatpush.xpose.msra.mxu0 0.0
    %1017 = vmatpush.xpose.msra.mxu0 0.0
    %1018 = vmatpush.xpose.msra.mxu0 0.0
    %1019 = vmatpush.xpose.msra.mxu0 0.0
    %1020 = vmatpush.xpose.msra.mxu0 0.0
    %1021 = vmatpush.xpose.msra.mxu0 0.0
    %1022 = vmatpush.xpose.msra.mxu0 0.0
    %1023 = vmatpush.xpose.msra.mxu0 0.0
    %1024 = vmatpush.xpose.msra.mxu0 0.0
    %1025 = vmatpush.xpose.msra.mxu0 0.0
    %1026 = vmatpush.xpose.msra.mxu0 0.0
    %1027 = vmatpush.xpose.msra.mxu0 %v1011
    %1028 = vmatpush.xpose.msra.mxu0 %v1008
    %1029 = vmatmul.f32.gmra.mxu0 %v1002
    %v1030 = vpop.f32.mrf.mxu0
    %v1031 = vadd.f32 0.0, %v1030
    %1032 = vmatmul.f32.gmra.mxu0 %v1005
    %v1033 = vpop.f32.mrf.mxu0
    %v1034 = vadd.f32 0.0, %v1033
    %1035 = vdwg.mxu0
    %v1037 = vsel %vm930, %v395, 0
    %v1040 = vsel %vm930, %v449, 0
    %v1043 = vsel %vm930, %v635, 0
    %v1046 = vsel %vm930, %v689, 0
    %1048 = vmatpush.xpose.msra.mxu0 0.0
    %1049 = vmatpush.xpose.msra.mxu0 0.0
    %1050 = vmatpush.xpose.msra.mxu0 0.0
    %1051 = vmatpush.xpose.msra.mxu0 0.0
    %1052 = vmatpush.xpose.msra.mxu0 0.0
    %1053 = vmatpush.xpose.msra.mxu0 0.0
    %1054 = vmatpush.xpose.msra.mxu0 0.0
    %1055 = vmatpush.xpose.msra.mxu0 0.0
    %1056 = vmatpush.xpose.msra.mxu0 0.0
    %1057 = vmatpush.xpose.msra.mxu0 0.0
    %1058 = vmatpush.xpose.msra.mxu0 0.0
    %1059 = vmatpush.xpose.msra.mxu0 0.0
    %1060 = vmatpush.xpose.msra.mxu0 0.0
    %1061 = vmatpush.xpose.msra.mxu0 0.0
    %1062 = vmatpush.xpose.msra.mxu0 %v1046
    %1063 = vmatpush.xpose.msra.mxu0 %v1043
    %1064 = vmatmul.f32.gmra.mxu0 %v1037
    %v1065 = vpop.f32.mrf.mxu0
    %v1066 = vadd.f32 0.0, %v1065
    %1067 = vmatmul.f32.gmra.mxu0 %v1040
    %v1068 = vpop.f32.mrf.mxu0
    %v1069 = vadd.f32 0.0, %v1068
    %1070 = vdwg.mxu0
    %v1071 = vlaneseq
    %v1072 = vshrl.u32 %v1071, 7
    %v1073 = vadd.s32 %v1072, 8
    %v1074 = vlaneseq
    %v1075 = vand.u32 %v1074, 127
    %v1076 = vxor.u32 %v1072, %v1075
    %v1077 = vxor.u32 %v1073, %v1075
    %v1078 = vand.u32 %v1076, 4294967288
    %v1079 = vand.u32 %v1077, 4294967288
    %vm1080 = vcmp.eq.s32.totalorder %v1078, 0
    %vm1081 = vcmp.eq.s32.totalorder %v1079, 0
    %v1082 = vsel %vm1080, 1, 0
    %v1083 = vsel %vm1081, 1, 0
    %vm1084 = vcmp.eq.s32.totalorder %v1082, 1
    %vm1085 = vcmp.eq.s32.totalorder %v1083, 1
    %v1086 = vsel %vm1084, %v961, -1e+30
    %v1087 = vsel %vm1085, %v964, -1e+30
    %v1088 = vsel %vm1084, %v996, -1e+30
    %v1089 = vsel %vm1085, %v999, -1e+30
    %v1090 = vsel %vm1084, %v1031, -1e+30
    %v1091 = vsel %vm1085, %v1034, -1e+30
    %v1092 = vsel %vm1084, %v1066, -1e+30
    %v1093 = vsel %vm1085, %v1069, -1e+30
    %vm1094 = vcmask 130048
    %v1095 = vsel %vm1094, %v1086, -inf
    %1096 = vmax.xlane.f32.xlu0 %v1095
    %v1097 = vpop.xlane.xlu0 %1096
    %v1098 = vsel %vm1094, %v1087, -inf
    %1099 = vmax.xlane.f32.xlu0 %v1098
    %v1100 = vpop.xlane.xlu0 %1099
    %v1101 = vsel %vm1094, %v1088, -inf
    %1102 = vmax.xlane.f32.xlu0 %v1101
    %v1103 = vpop.xlane.xlu0 %1102
    %v1104 = vsel %vm1094, %v1089, -inf
    %1105 = vmax.xlane.f32.xlu0 %v1104
    %v1106 = vpop.xlane.xlu0 %1105
    %v1107 = vsel %vm1094, %v1090, -inf
    %1108 = vmax.xlane.f32.xlu0 %v1107
    %v1109 = vpop.xlane.xlu0 %1108
    %v1110 = vsel %vm1094, %v1091, -inf
    %1111 = vmax.xlane.f32.xlu0 %v1110
    %v1112 = vpop.xlane.xlu0 %1111
    %v1113 = vsel %vm1094, %v1092, -inf
    %1114 = vmax.xlane.f32.xlu0 %v1113
    %v1115 = vpop.xlane.xlu0 %1114
    %v1116 = vsel %vm1094, %v1093, -inf
    %1117 = vmax.xlane.f32.xlu0 %v1116
    %v1118 = vpop.xlane.xlu0 %1117
    %v1119 = vsub.f32 %v1086, %v1097
    %v1120 = vsub.f32 %v1087, %v1100
    %v1121 = vsub.f32 %v1088, %v1103
    %v1122 = vsub.f32 %v1089, %v1106
    %v1123 = vsub.f32 %v1090, %v1109
    %v1124 = vsub.f32 %v1091, %v1112
    %v1125 = vsub.f32 %v1092, %v1115
    %v1126 = vsub.f32 %v1093, %v1118
    %v1127 = vmul.f32 %v1119, 1.442695
    %v1128 = vpow.pop %v1127
    %v1129 = vmul.f32 %v1120, 1.442695
    %v1130 = vpow.pop %v1129
    %v1131 = vmul.f32 %v1121, 1.442695
    %v1132 = vpow.pop %v1131
    %v1133 = vmul.f32 %v1122, 1.442695
    %v1134 = vpow.pop %v1133
    %v1135 = vmul.f32 %v1123, 1.442695
    %v1136 = vpow.pop %v1135
    %v1137 = vmul.f32 %v1124, 1.442695
    %v1138 = vpow.pop %v1137
    %v1139 = vmul.f32 %v1125, 1.442695
    %v1140 = vpow.pop %v1139
    %v1141 = vmul.f32 %v1126, 1.442695
    %v1142 = vpow.pop %v1141
    %v1143 = vsel %vm1094, %v1128, 0.0
    %1144 = vadd.xlane.f32.xlu0 %v1143
    %v1145 = vpop.xlane.xlu0 %1144
    %v1146 = vsel %vm1094, %v1130, 0.0
    %1147 = vadd.xlane.f32.xlu0 %v1146
    %v1148 = vpop.xlane.xlu0 %1147
    %v1149 = vsel %vm1094, %v1132, 0.0
    %1150 = vadd.xlane.f32.xlu0 %v1149
    %v1151 = vpop.xlane.xlu0 %1150
    %v1152 = vsel %vm1094, %v1134, 0.0
    %1153 = vadd.xlane.f32.xlu0 %v1152
    %v1154 = vpop.xlane.xlu0 %1153
    %v1155 = vsel %vm1094, %v1136, 0.0
    %1156 = vadd.xlane.f32.xlu0 %v1155
    %v1157 = vpop.xlane.xlu0 %1156
    %v1158 = vsel %vm1094, %v1138, 0.0
    %1159 = vadd.xlane.f32.xlu0 %v1158
    %v1160 = vpop.xlane.xlu0 %1159
    %v1161 = vsel %vm1094, %v1140, 0.0
    %1162 = vadd.xlane.f32.xlu0 %v1161
    %v1163 = vpop.xlane.xlu0 %1162
    %v1164 = vsel %vm1094, %v1142, 0.0
    %1165 = vadd.xlane.f32.xlu0 %v1164
    %v1166 = vpop.xlane.xlu0 %1165
    %v1167 = vrcp.pop %v1145
    %v1168 = vmul.f32 %v1145, %v1167
    %v1169 = vsub.f32 1.0, %v1168
    %v1170 = vmul.f32 %v1167, %v1169
    %v1171 = vadd.f32 %v1167, %v1170
    %vm1172 = vweird.f32 %v1145
    %vm1173 = vweird.f32 %v1167
    %vm1174 = vmor %vm1172, %vm1173
    %v1175 = vsel %vm1174, %v1167, %v1171
    %v1176 = vand.u32 2147483647, %v1145
    %vm1177 = vcmp.eq.f32.partialorder %v1176, 8.507059e+37
    %v1178 = vand.u32 %v1145, 2147483648
    %v1179 = vor.u32 1.1754944e-38, %v1178
    %v1180 = vsel %vm1177, %v1179, %v1175
    %v1181 = vrcp.pop %v1148
    %v1182 = vmul.f32 %v1148, %v1181
    %v1183 = vsub.f32 1.0, %v1182
    %v1184 = vmul.f32 %v1181, %v1183
    %v1185 = vadd.f32 %v1181, %v1184
    %vm1186 = vweird.f32 %v1148
    %vm1187 = vweird.f32 %v1181
    %vm1188 = vmor %vm1186, %vm1187
    %v1189 = vsel %vm1188, %v1181, %v1185
    %v1190 = vand.u32 2147483647, %v1148
    %vm1191 = vcmp.eq.f32.partialorder %v1190, 8.507059e+37
    %v1192 = vand.u32 %v1148, 2147483648
    %v1193 = vor.u32 1.1754944e-38, %v1192
    %v1194 = vsel %vm1191, %v1193, %v1189
    %v1195 = vrcp.pop %v1151
    %v1196 = vmul.f32 %v1151, %v1195
    %v1197 = vsub.f32 1.0, %v1196
    %v1198 = vmul.f32 %v1195, %v1197
    %v1199 = vadd.f32 %v1195, %v1198
    %vm1200 = vweird.f32 %v1151
    %vm1201 = vweird.f32 %v1195
    %vm1202 = vmor %vm1200, %vm1201
    %v1203 = vsel %vm1202, %v1195, %v1199
    %v1204 = vand.u32 2147483647, %v1151
    %vm1205 = vcmp.eq.f32.partialorder %v1204, 8.507059e+37
    %v1206 = vand.u32 %v1151, 2147483648
    %v1207 = vor.u32 1.1754944e-38, %v1206
    %v1208 = vsel %vm1205, %v1207, %v1203
    %v1209 = vrcp.pop %v1154
    %v1210 = vmul.f32 %v1154, %v1209
    %v1211 = vsub.f32 1.0, %v1210
    %v1212 = vmul.f32 %v1209, %v1211
    %v1213 = vadd.f32 %v1209, %v1212
    %vm1214 = vweird.f32 %v1154
    %vm1215 = vweird.f32 %v1209
    %vm1216 = vmor %vm1214, %vm1215
    %v1217 = vsel %vm1216, %v1209, %v1213
    %v1218 = vand.u32 2147483647, %v1154
    %vm1219 = vcmp.eq.f32.partialorder %v1218, 8.507059e+37
    %v1220 = vand.u32 %v1154, 2147483648
    %v1221 = vor.u32 1.1754944e-38, %v1220
    %v1222 = vsel %vm1219, %v1221, %v1217
    %v1223 = vrcp.pop %v1157
    %v1224 = vmul.f32 %v1157, %v1223
    %v1225 = vsub.f32 1.0, %v1224
    %v1226 = vmul.f32 %v1223, %v1225
    %v1227 = vadd.f32 %v1223, %v1226
    %vm1228 = vweird.f32 %v1157
    %vm1229 = vweird.f32 %v1223
    %vm1230 = vmor %vm1228, %vm1229
    %v1231 = vsel %vm1230, %v1223, %v1227
    %v1232 = vand.u32 2147483647, %v1157
    %vm1233 = vcmp.eq.f32.partialorder %v1232, 8.507059e+37
    %v1234 = vand.u32 %v1157, 2147483648
    %v1235 = vor.u32 1.1754944e-38, %v1234
    %v1236 = vsel %vm1233, %v1235, %v1231
    %v1237 = vrcp.pop %v1160
    %v1238 = vmul.f32 %v1160, %v1237
    %v1239 = vsub.f32 1.0, %v1238
    %v1240 = vmul.f32 %v1237, %v1239
    %v1241 = vadd.f32 %v1237, %v1240
    %vm1242 = vweird.f32 %v1160
    %vm1243 = vweird.f32 %v1237
    %vm1244 = vmor %vm1242, %vm1243
    %v1245 = vsel %vm1244, %v1237, %v1241
    %v1246 = vand.u32 2147483647, %v1160
    %vm1247 = vcmp.eq.f32.partialorder %v1246, 8.507059e+37
    %v1248 = vand.u32 %v1160, 2147483648
    %v1249 = vor.u32 1.1754944e-38, %v1248
    %v1250 = vsel %vm1247, %v1249, %v1245
    %v1251 = vrcp.pop %v1163
    %v1252 = vmul.f32 %v1163, %v1251
    %v1253 = vsub.f32 1.0, %v1252
    %v1254 = vmul.f32 %v1251, %v1253
    %v1255 = vadd.f32 %v1251, %v1254
    %vm1256 = vweird.f32 %v1163
    %vm1257 = vweird.f32 %v1251
    %vm1258 = vmor %vm1256, %vm1257
    %v1259 = vsel %vm1258, %v1251, %v1255
    %v1260 = vand.u32 2147483647, %v1163
    %vm1261 = vcmp.eq.f32.partialorder %v1260, 8.507059e+37
    %v1262 = vand.u32 %v1163, 2147483648
    %v1263 = vor.u32 1.1754944e-38, %v1262
    %v1264 = vsel %vm1261, %v1263, %v1259
    %v1265 = vrcp.pop %v1166
    %v1266 = vmul.f32 %v1166, %v1265
    %v1267 = vsub.f32 1.0, %v1266
    %v1268 = vmul.f32 %v1265, %v1267
    %v1269 = vadd.f32 %v1265, %v1268
    %vm1270 = vweird.f32 %v1166
    %vm1271 = vweird.f32 %v1265
    %vm1272 = vmor %vm1270, %vm1271
    %v1273 = vsel %vm1272, %v1265, %v1269
    %v1274 = vand.u32 2147483647, %v1166
    %vm1275 = vcmp.eq.f32.partialorder %v1274, 8.507059e+37
    %v1276 = vand.u32 %v1166, 2147483648
    %v1277 = vor.u32 1.1754944e-38, %v1276
    %v1278 = vsel %vm1275, %v1277, %v1273
    %v1279 = vmul.f32 %v1128, %v1180
    %v1280 = vmul.f32 %v1130, %v1194
    %v1281 = vmul.f32 %v1132, %v1208
    %v1282 = vmul.f32 %v1134, %v1222
    %v1283 = vmul.f32 %v1136, %v1236
    %v1284 = vmul.f32 %v1138, %v1250
    %v1285 = vmul.f32 %v1140, %v1264
    %v1286 = vmul.f32 %v1142, %v1278
    %v1288 = vsel %vm1094, %v1279, 0
    %v1291 = vsel %vm1094, %v1280, 0
    %1293 = vmatpush.msra.mxu0 0.0
    %1294 = vmatpush.msra.mxu0 0.0
    %1295 = vmatpush.msra.mxu0 0.0
    %1296 = vmatpush.msra.mxu0 0.0
    %1297 = vmatpush.msra.mxu0 0.0
    %1298 = vmatpush.msra.mxu0 0.0
    %1299 = vmatpush.msra.mxu0 0.0
    %1300 = vmatpush.msra.mxu0 0.0
    %1301 = vmatpush.msra.mxu0 0.0
    %1302 = vmatpush.msra.mxu0 0.0
    %1303 = vmatpush.msra.mxu0 0.0
    %1304 = vmatpush.msra.mxu0 0.0
    %1305 = vmatpush.msra.mxu0 0.0
    %1306 = vmatpush.msra.mxu0 0.0
    %1307 = vmatpush.msra.mxu0 %v923
    %1308 = vmatpush.msra.mxu0 %v869
    %1309 = vmatmul.f32.gmra.mxu0 %v1288
    %v1310 = vpop.f32.mrf.mxu0
    %v1311 = vadd.f32 0.0, %v1310
    %1312 = vmatmul.f32.gmra.mxu0 %v1291
    %v1313 = vpop.f32.mrf.mxu0
    %v1314 = vadd.f32 0.0, %v1313
    %1315 = vdwg.mxu0
    %v1317 = vsel %vm1094, %v1281, 0
    %v1320 = vsel %vm1094, %v1282, 0
    %1322 = vmatpush.msra.mxu0 0.0
    %1323 = vmatpush.msra.mxu0 0.0
    %1324 = vmatpush.msra.mxu0 0.0
    %1325 = vmatpush.msra.mxu0 0.0
    %1326 = vmatpush.msra.mxu0 0.0
    %1327 = vmatpush.msra.mxu0 0.0
    %1328 = vmatpush.msra.mxu0 0.0
    %1329 = vmatpush.msra.mxu0 0.0
    %1330 = vmatpush.msra.mxu0 0.0
    %1331 = vmatpush.msra.mxu0 0.0
    %1332 = vmatpush.msra.mxu0 0.0
    %1333 = vmatpush.msra.mxu0 0.0
    %1334 = vmatpush.msra.mxu0 0.0
    %1335 = vmatpush.msra.mxu0 0.0
    %1336 = vmatpush.msra.mxu0 %v925
    %1337 = vmatpush.msra.mxu0 %v871
    %1338 = vmatmul.f32.gmra.mxu0 %v1317
    %v1339 = vpop.f32.mrf.mxu0
    %v1340 = vadd.f32 0.0, %v1339
    %1341 = vmatmul.f32.gmra.mxu0 %v1320
    %v1342 = vpop.f32.mrf.mxu0
    %v1343 = vadd.f32 0.0, %v1342
    %1344 = vdwg.mxu0
    %v1346 = vsel %vm1094, %v1283, 0
    %v1349 = vsel %vm1094, %v1284, 0
    %1351 = vmatpush.msra.mxu0 0.0
    %1352 = vmatpush.msra.mxu0 0.0
    %1353 = vmatpush.msra.mxu0 0.0
    %1354 = vmatpush.msra.mxu0 0.0
    %1355 = vmatpush.msra.mxu0 0.0
    %1356 = vmatpush.msra.mxu0 0.0
    %1357 = vmatpush.msra.mxu0 0.0
    %1358 = vmatpush.msra.mxu0 0.0
    %1359 = vmatpush.msra.mxu0 0.0
    %1360 = vmatpush.msra.mxu0 0.0
    %1361 = vmatpush.msra.mxu0 0.0
    %1362 = vmatpush.msra.mxu0 0.0
    %1363 = vmatpush.msra.mxu0 0.0
    %1364 = vmatpush.msra.mxu0 0.0
    %1365 = vmatpush.msra.mxu0 %v927
    %1366 = vmatpush.msra.mxu0 %v873
    %1367 = vmatmul.f32.gmra.mxu0 %v1346
    %v1368 = vpop.f32.mrf.mxu0
    %v1369 = vadd.f32 0.0, %v1368
    %1370 = vmatmul.f32.gmra.mxu0 %v1349
    %v1371 = vpop.f32.mrf.mxu0
    %v1372 = vadd.f32 0.0, %v1371
    %1373 = vdwg.mxu0
    %v1375 = vsel %vm1094, %v1285, 0
    %v1378 = vsel %vm1094, %v1286, 0
    %1380 = vmatpush.msra.mxu0 0.0
    %1381 = vmatpush.msra.mxu0 0.0
    %1382 = vmatpush.msra.mxu0 0.0
    %1383 = vmatpush.msra.mxu0 0.0
    %1384 = vmatpush.msra.mxu0 0.0
    %1385 = vmatpush.msra.mxu0 0.0
    %1386 = vmatpush.msra.mxu0 0.0
    %1387 = vmatpush.msra.mxu0 0.0
    %1388 = vmatpush.msra.mxu0 0.0
    %1389 = vmatpush.msra.mxu0 0.0
    %1390 = vmatpush.msra.mxu0 0.0
    %1391 = vmatpush.msra.mxu0 0.0
    %1392 = vmatpush.msra.mxu0 0.0
    %1393 = vmatpush.msra.mxu0 0.0
    %1394 = vmatpush.msra.mxu0 %v929
    %1395 = vmatpush.msra.mxu0 %v875
    %1396 = vmatmul.f32.gmra.mxu0 %v1375
    %v1397 = vpop.f32.mrf.mxu0
    %v1398 = vadd.f32 0.0, %v1397
    %1399 = vmatmul.f32.gmra.mxu0 %v1378
    %v1400 = vpop.f32.mrf.mxu0
    %v1401 = vadd.f32 0.0, %v1400
    %1402 = vdwg.mxu0
    %v1403 = vrot.slane %v1369, 4
    %v1404 = vsel %vm230, %v1403, %v1311
    %v1405 = vrot.slane %v1311, 4
    %v1406 = vsel %vm230, %v1369, %v1405
    %v1408 = vunpack.c.l.s4 1983009808
    %v1409 = vunpack.c.0.s8 %v1408
    %v1410 = vperm.slane %v1404, %v1409
    %v1412 = vunpack.c.l.s4 1983009808
    %v1413 = vunpack.c.0.s8 %v1412
    %v1414 = vperm.slane %v1406, %v1413
    %v1415 = vrot.slane %v1398, 4
    %v1416 = vsel %vm230, %v1415, %v1340
    %v1417 = vrot.slane %v1340, 4
    %v1418 = vsel %vm230, %v1398, %v1417
    %v1420 = vunpack.c.l.s4 1983009808
    %v1421 = vunpack.c.0.s8 %v1420
    %v1422 = vperm.slane %v1416, %v1421
    %v1424 = vunpack.c.l.s4 1983009808
    %v1425 = vunpack.c.0.s8 %v1424
    %v1426 = vperm.slane %v1418, %v1425
    %v1427 = vrot.slane %v1422, 4
    %v1428 = vsel %vm230, %v1427, %v1410
    %v1429 = vrot.slane %v1410, 4
    %v1430 = vsel %vm230, %v1422, %v1429
    %v1432 = vunpack.c.l.s4 1934713408
    %v1433 = vunpack.c.0.s8 %v1432
    %v1434 = vperm.slane %v1428, %v1433
    %v1436 = vunpack.c.l.s4 1934713408
    %v1437 = vunpack.c.0.s8 %v1436
    %v1438 = vperm.slane %v1430, %v1437
    %v1439 = vrot.slane %v1426, 4
    %v1440 = vsel %vm230, %v1439, %v1414
    %v1441 = vrot.slane %v1414, 4
    %v1442 = vsel %vm230, %v1426, %v1441
    %v1444 = vunpack.c.l.s4 1934713408
    %v1445 = vunpack.c.0.s8 %v1444
    %v1446 = vperm.slane %v1440, %v1445
    %v1448 = vunpack.c.l.s4 1934713408
    %v1449 = vunpack.c.0.s8 %v1448
    %v1450 = vperm.slane %v1442, %v1449
    %v1451 = vrot.slane %v1434, 4
    %v1452 = vsel %vm230, 0.0, %v1451
    %v1453 = vrot.slane %v1438, 4
    %v1454 = vsel %vm230, 0.0, %v1453
    %v1455 = vrot.slane %v1446, 4
    %v1456 = vsel %vm230, 0.0, %v1455
    %v1457 = vrot.slane %v1450, 4
    %v1458 = vsel %vm230, 0.0, %v1457
    %v1459 = vrot.slane %v1372, 4
    %v1460 = vsel %vm230, %v1459, %v1314
    %v1461 = vrot.slane %v1314, 4
    %v1462 = vsel %vm230, %v1372, %v1461
    %v1464 = vunpack.c.l.s4 1983009808
    %v1465 = vunpack.c.0.s8 %v1464
    %v1466 = vperm.slane %v1460, %v1465
    %v1468 = vunpack.c.l.s4 1983009808
    %v1469 = vunpack.c.0.s8 %v1468
    %v1470 = vperm.slane %v1462, %v1469
    %v1471 = vrot.slane %v1401, 4
    %v1472 = vsel %vm230, %v1471, %v1343
    %v1473 = vrot.slane %v1343, 4
    %v1474 = vsel %vm230, %v1401, %v1473
    %v1476 = vunpack.c.l.s4 1983009808
    %v1477 = vunpack.c.0.s8 %v1476
    %v1478 = vperm.slane %v1472, %v1477
    %v1480 = vunpack.c.l.s4 1983009808
    %v1481 = vunpack.c.0.s8 %v1480
    %v1482 = vperm.slane %v1474, %v1481
    %v1483 = vrot.slane %v1478, 4
    %v1484 = vsel %vm230, %v1483, %v1466
    %v1485 = vrot.slane %v1466, 4
    %v1486 = vsel %vm230, %v1478, %v1485
    %v1488 = vunpack.c.l.s4 1934713408
    %v1489 = vunpack.c.0.s8 %v1488
    %v1490 = vperm.slane %v1484, %v1489
    %v1492 = vunpack.c.l.s4 1934713408
    %v1493 = vunpack.c.0.s8 %v1492
    %v1494 = vperm.slane %v1486, %v1493
    %v1495 = vrot.slane %v1482, 4
    %v1496 = vsel %vm230, %v1495, %v1470
    %v1497 = vrot.slane %v1470, 4
    %v1498 = vsel %vm230, %v1482, %v1497
    %v1500 = vunpack.c.l.s4 1934713408
    %v1501 = vunpack.c.0.s8 %v1500
    %v1502 = vperm.slane %v1496, %v1501
    %v1504 = vunpack.c.l.s4 1934713408
    %v1505 = vunpack.c.0.s8 %v1504
    %v1506 = vperm.slane %v1498, %v1505
    %v1507 = vrot.slane %v1490, 4
    %v1508 = vsel %vm230, 0.0, %v1507
    %v1509 = vrot.slane %v1494, 4
    %v1510 = vsel %vm230, 0.0, %v1509
    %v1511 = vrot.slane %v1502, 4
    %v1512 = vsel %vm230, 0.0, %v1511
    %v1513 = vrot.slane %v1506, 4
    %v1514 = vsel %vm230, 0.0, %v1513
    %v1515 = vsel %vm230, %v1453, %v1434
    %v1517 = vunpack.c.l.s4 1983009808
    %v1518 = vunpack.c.0.s8 %v1517
    %v1519 = vperm.slane %v1515, %v1518
    %v1520 = vrot.slane %v1454, 4
    %v1521 = vsel %vm230, %v1520, %v1452
    %v1523 = vunpack.c.l.s4 1983009808
    %v1524 = vunpack.c.0.s8 %v1523
    %v1525 = vperm.slane %v1521, %v1524
    %v1526 = vsel %vm230, %v1457, %v1446
    %v1528 = vunpack.c.l.s4 1983009808
    %v1529 = vunpack.c.0.s8 %v1528
    %v1530 = vperm.slane %v1526, %v1529
    %v1531 = vrot.slane %v1458, 4
    %v1532 = vsel %vm230, %v1531, %v1456
    %v1534 = vunpack.c.l.s4 1983009808
    %v1535 = vunpack.c.0.s8 %v1534
    %v1536 = vperm.slane %v1532, %v1535
    %v1537 = vrot.slane %v1525, 4
    %v1538 = vsel %vm230, %v1537, %v1519
    %v1539 = vrot.slane %v1519, 4
    %v1540 = vsel %vm230, %v1525, %v1539
    %v1542 = vunpack.c.l.s4 1934713408
    %v1543 = vunpack.c.0.s8 %v1542
    %v1544 = vperm.slane %v1538, %v1543
    %v1546 = vunpack.c.l.s4 1934713408
    %v1547 = vunpack.c.0.s8 %v1546
    %v1548 = vperm.slane %v1540, %v1547
    %v1549 = vrot.slane %v1536, 4
    %v1550 = vsel %vm230, %v1549, %v1530
    %v1551 = vrot.slane %v1530, 4
    %v1552 = vsel %vm230, %v1536, %v1551
    %v1554 = vunpack.c.l.s4 1934713408
    %v1555 = vunpack.c.0.s8 %v1554
    %v1556 = vperm.slane %v1550, %v1555
    %v1558 = vunpack.c.l.s4 1934713408
    %v1559 = vunpack.c.0.s8 %v1558
    %v1560 = vperm.slane %v1552, %v1559
    %v1561 = vrot.slane %v1556, 4
    %v1562 = vsel %vm230, %v1561, %v1544
    %v1563 = vrot.slane %v1544, 4
    %v1564 = vsel %vm230, %v1556, %v1563
    %v1565 = vrot.slane %v1560, 4
    %v1566 = vsel %vm230, %v1565, %v1548
    %v1567 = vrot.slane %v1548, 4
    %v1568 = vsel %vm230, %v1560, %v1567
    %v1569 = vsel %vm230, %v1509, %v1490
    %v1571 = vunpack.c.l.s4 1983009808
    %v1572 = vunpack.c.0.s8 %v1571
    %v1573 = vperm.slane %v1569, %v1572
    %v1574 = vrot.slane %v1510, 4
    %v1575 = vsel %vm230, %v1574, %v1508
    %v1577 = vunpack.c.l.s4 1983009808
    %v1578 = vunpack.c.0.s8 %v1577
    %v1579 = vperm.slane %v1575, %v1578
    %v1580 = vsel %vm230, %v1513, %v1502
    %v1582 = vunpack.c.l.s4 1983009808
    %v1583 = vunpack.c.0.s8 %v1582
    %v1584 = vperm.slane %v1580, %v1583
    %v1585 = vrot.slane %v1514, 4
    %v1586 = vsel %vm230, %v1585, %v1512
    %v1588 = vunpack.c.l.s4 1983009808
    %v1589 = vunpack.c.0.s8 %v1588
    %v1590 = vperm.slane %v1586, %v1589
    %v1591 = vrot.slane %v1579, 4
    %v1592 = vsel %vm230, %v1591, %v1573
    %v1593 = vrot.slane %v1573, 4
    %v1594 = vsel %vm230, %v1579, %v1593
    %v1596 = vunpack.c.l.s4 1934713408
    %v1597 = vunpack.c.0.s8 %v1596
    %v1598 = vperm.slane %v1592, %v1597
    %v1600 = vunpack.c.l.s4 1934713408
    %v1601 = vunpack.c.0.s8 %v1600
    %v1602 = vperm.slane %v1594, %v1601
    %v1603 = vrot.slane %v1590, 4
    %v1604 = vsel %vm230, %v1603, %v1584
    %v1605 = vrot.slane %v1584, 4
    %v1606 = vsel %vm230, %v1590, %v1605
    %v1608 = vunpack.c.l.s4 1934713408
    %v1609 = vunpack.c.0.s8 %v1608
    %v1610 = vperm.slane %v1604, %v1609
    %v1612 = vunpack.c.l.s4 1934713408
    %v1613 = vunpack.c.0.s8 %v1612
    %v1614 = vperm.slane %v1606, %v1613
    %v1615 = vrot.slane %v1610, 4
    %v1616 = vsel %vm230, %v1615, %v1598
    %v1617 = vrot.slane %v1598, 4
    %v1618 = vsel %vm230, %v1610, %v1617
    %v1619 = vrot.slane %v1614, 4
    %v1620 = vsel %vm230, %v1619, %v1602
    %v1621 = vrot.slane %v1602, 4
    %v1622 = vsel %vm230, %v1614, %v1621
    %1625 = vrot.lane.b32.xlu0 %v1564, 8
    %v1626 = vpop.permute.xlu0 %1625
    %1627 = vrot.lane.b32.xlu0 %v1618, 8
    %v1628 = vpop.permute.xlu0 %1627
    %1633 = vrot.lane.b32.xlu0 %v1566, 16
    %v1634 = vpop.permute.xlu0 %1633
    %1635 = vrot.lane.b32.xlu0 %v1620, 16
    %v1636 = vpop.permute.xlu0 %1635
    %1641 = vrot.lane.b32.xlu0 %v1568, 24
    %v1642 = vpop.permute.xlu0 %1641
    %1643 = vrot.lane.b32.xlu0 %v1622, 24
    %v1644 = vpop.permute.xlu0 %1643
    %v1647 = vsel %vm930, %v1562, %v1626
    %v1648 = vsel %vm930, %v1616, %v1628
    %v1649 = vsel %vm1094, %v1647, %v1634
    %v1650 = vsel %vm1094, %v1648, %v1636
    %vm1651 = vcmask 195584
    %v1652 = vsel %vm1651, %v1649, %v1642
    %v1653 = vsel %vm1651, %v1650, %v1644
    %s1654 = scalar_lea.vmem [#allocation8], 96
    %v1655 = vld [vmem:[%s1654] sm:$0xff]
    %v1656 = vld [vmem:[%s1654 + $0x8] sm:$0xff]
    %v1657 = vld [vmem:[%s1654 + $0x10] sm:$0xff]
    %v1658 = vld [vmem:[%s1654 + $0x18] sm:$0xff]
    %v1659 = vperm.slane %v99, 3
    %v1661 = vsel %vm105, %v1652, 0
    %v1664 = vsel %vm105, %v1653, 0
    %1666 = vmatpush.msra.mxu0 0.0
    %1667 = vmatpush.msra.mxu0 0.0
    %1668 = vmatpush.msra.mxu0 0.0
    %1669 = vmatpush.msra.mxu0 0.0
    %1670 = vmatpush.msra.mxu0 0.0
    %1671 = vmatpush.msra.mxu0 0.0
    %1672 = vmatpush.msra.mxu0 0.0
    %1673 = vmatpush.msra.mxu0 0.0
    %1674 = vmatpush.msra.mxu0 0.0
    %1675 = vmatpush.msra.mxu0 0.0
    %1676 = vmatpush.msra.mxu0 0.0
    %1677 = vmatpush.msra.mxu0 0.0
    %1678 = vmatpush.msra.mxu0 %v1658
    %1679 = vmatpush.msra.mxu0 %v1657
    %1680 = vmatpush.msra.mxu0 %v1656
    %1681 = vmatpush.msra.mxu0 %v1655
    %1682 = vmatmul.f32.gmra.mxu0 %v1661
    %v1683 = vpop.f32.mrf.mxu0
    %v1684 = vadd.f32 %v1659, %v1683
    %1685 = vmatmul.f32.gmra.mxu0 %v1664
    %v1686 = vpop.f32.mrf.mxu0
    %v1687 = vadd.f32 %v1659, %v1686
    %1688 = vdwg.mxu0
    %v1689 = vadd.f32 %v97, %v1684
    %v1690 = vadd.f32 %v98, %v1687
    %v1691 = vsel %vm105, %v1689, 0.0
    %1692 = vadd.xlane.f32.xlu0 %v1691
    %v1693 = vpop.xlane.xlu0 %1692
    %v1694 = vsel %vm105, %v1690, 0.0
    %1695 = vadd.xlane.f32.xlu0 %v1694
    %v1696 = vpop.xlane.xlu0 %1695
    %v1697 = vrcp.pop 32.0
    %v1698 = vmul.f32 32.0, %v1697
    %v1699 = vsub.f32 1.0, %v1698
    %v1700 = vmul.f32 %v1697, %v1699
    %v1701 = vadd.f32 %v1697, %v1700
    %vm1702 = vweird.f32 %v1697
    %v1703 = vsel %vm1702, %v1697, %v1701
    %v1704 = vmul.f32 %v1693, %v1703
    %v1705 = vmul.f32 %v1696, %v1703
    %v1706 = vsub.f32 %v1689, %v1704
    %v1707 = vsub.f32 %v1690, %v1705
    %v1708 = vmul.f32 %v1706, %v1706
    %v1709 = vmul.f32 %v1707, %v1707
    %v1710 = vsel %vm105, %v1708, 0.0
    %1711 = vadd.xlane.f32.xlu0 %v1710
    %v1712 = vpop.xlane.xlu0 %1711
    %v1713 = vsel %vm105, %v1709, 0.0
    %1714 = vadd.xlane.f32.xlu0 %v1713
    %v1715 = vpop.xlane.xlu0 %1714
    %v1716 = vmul.f32 %v1712, %v1703
    %v1717 = vmul.f32 %v1715, %v1703
    %v1718 = vadd.f32 %v1716, 1e-05
    %v1719 = vadd.f32 %v1717, 1e-05
    %v1720 = vrsqrt.pop %v1718
    %v1721 = vmul.f32 %v1720, %v1718
    %v1722 = vmul.f32 %v1721, %v1720
    %v1723 = vmul.f32 0.5, %v1722
    %v1724 = vsub.f32 1.5, %v1723
    %v1725 = vmul.f32 %v1720, %v1724
    %vm1726 = vweird.f32 %v1718
    %vm1727 = vweird.f32 %v1720
    %vm1728 = vmor %vm1726, %vm1727
    %v1729 = vsel %vm1728, %v1720, %v1725
    %v1730 = vrsqrt.pop %v1719
    %v1731 = vmul.f32 %v1730, %v1719
    %v1732 = vmul.f32 %v1731, %v1730
    %v1733 = vmul.f32 0.5, %v1732
    %v1734 = vsub.f32 1.5, %v1733
    %v1735 = vmul.f32 %v1730, %v1734
    %vm1736 = vweird.f32 %v1719
    %vm1737 = vweird.f32 %v1730
    %vm1738 = vmor %vm1736, %vm1737
    %v1739 = vsel %vm1738, %v1730, %v1735
    %v1740 = vmul.f32 %v1706, %v1729
    %v1741 = vmul.f32 %v1707, %v1739
    %v1742 = vperm.slane %v99, 4
    %v1743 = vmul.f32 %v1740, %v1742
    %v1744 = vmul.f32 %v1741, %v1742
    %v1745 = vperm.slane %v99, 5
    %v1746 = vadd.f32 %v1743, %v1745
    %v1747 = vadd.f32 %v1744, %v1745
    %1748 = vst.msk [vmem:[#allocation11] sm:$0xff] %vm105, %v1746
    %1749 = vst.msk [vmem:[#allocation11 + $0x8] sm:$0xff] %vm105, %v1747
    // Predicated region
    $region42: #{tpu_custom_call.1} parent=1 // pred_check
      _
    $region43: #{tpu_custom_call.1} parent=1 // pred_check_branch
      %1751 = sbr.rel (0) target = $region45
    $region44: #{tpu_custom_call.1} parent=1 // pred_region
      %1753 = vsyncadd [#allocation4], 0
      %s1754 = sshll.u32 [#allocation11], 4
      %s1755 = int_to_ptr.vmem [resolvable:$true] %s1754
      %s1756 = sshll.u32 %s5, 4
      %s1757 = int_to_ptr.hbm [resolvable:$true] %s1756
      %1762 = dma.vmem_to_hbm [thread:$0]  %s1755, 256, %s1757, [#allocation4], 128, 128, 8
    $region45: #{tpu_custom_call.1} parent=1 // pred_fallthru
      _
    // Predicated region
    $region46: #{tpu_custom_call.1} parent=1 // pred_check
      _
    $region47: #{tpu_custom_call.1} parent=1 // pred_check_branch
      %1764 = sbr.rel (0) target = $region49
    $region48: #{tpu_custom_call.1} parent=1 // pred_region
      %1766 = dma.done [#allocation4], 256
    $region49: #{tpu_custom_call.1} parent=1 // pred_fallthru
      _
    %1767 = vsyncpa [#allocation3], 1
    %1768 = vsyncpa [#allocation6], 1
    %1769 = vsyncpa [#allocation9], 1
    %1770 = vsyncpa [#allocation4], 1

</llo_original>
